<compile_context>
chip_gen: v6e
topology: v6e:2x2x1
jax: 0.10.0
libtpu: 0.0.40
codegen_flags: <defaults>
</compile_context>

<pallas_src>
import functools

import jax
import jax.numpy as jnp
from jax.experimental import pallas as pl
from jax.experimental.pallas import tpu as pltpu

# Logical (PyTorch) dims — constructor defaults of LSTM_NET.
INPUT_DIM = 6
HIDDEN_DIM = 6
TIME_LENGTH = 200
NUM_CLASSES = 12
FC1_OUT = 128

# Kernel layout constants.
GATE_PAD = 8                      # per-gate lane width (i|f|o|g, 8 lanes each)
GATES = 4 * GATE_PAD              # 32 gate lanes total = one masked vreg
CHUNK = 16                        # timesteps per FC1 block (16 * 8 lanes = 128)
N_CHUNKS = -(-TIME_LENGTH // CHUNK)   # 13
T_PAD = N_CHUNKS * CHUNK              # 208 (pad steps contribute 0 to FC1)
BB = 8                            # batch rows per grid step (sublane multiple)


def _lstm_net_kernel(xw_ref, whh_ref, fc1w_ref, fc1b_ref, fc2w_ref, fc2b_ref,
                     o_ref, *, n_chunks, chunk, bb):
    """Refs (per batch block):
      xw_ref  : (n_chunks, bb, chunk*32)  precomputed x@W_ih^T + b, lane-dense
      whh_ref : (8, 32)                   W_hh^T, gate order i|f|o|g, pad lanes 0
      fc1w_ref: (n_chunks, 128, 128)      FC1 weights blocked per time-chunk
      fc1b_ref: (1, 128)   fc2w_ref: (128, 128)   fc2b_ref: (1, 128)
      o_ref   : (bb, 128)                 lane-dense output slab
    """
    GP = GATE_PAD

    whh = whh_ref[...]                                   # (8, 32) — 1 vreg
    # Static lane mask: lanes [0, 24) = sigmoid gates (i,f,o); [24, 32) = tanh.
    lane = jax.lax.broadcasted_iota(jnp.int32, (bb, GATES), 1)
    sig_mask = lane < 3 * GP

    def chunk_body(c, carry):
        h, cst, acc = carry                              # (bb,8),(bb,8),(bb,128)
        xw_c = xw_ref[c]                                 # (bb, chunk*32)
        w1_c = fc1w_ref[c]                               # (128, 128)
        hs = []
        for j in range(chunk):                           # statically unrolled
            # gates = xw_t + h @ W_hh^T        (single tiny MXU push per step)
            g = xw_c[:, j * GATES:(j + 1) * GATES] + jnp.dot(
                h, whh, preferred_element_type=jnp.float32)       # (bb, 32)
            # One tanh for the whole gate vreg; sigmoid = 0.5*tanh(0.5x)+0.5.
            t = jnp.tanh(jnp.where(sig_mask, 0.5 * g, g))
            a = jnp.where(sig_mask, 0.5 * t + 0.5, t)    # [sig i|sig f|sig o|tanh g]
            i_g = a[:, 0 * GP:1 * GP]
            f_g = a[:, 1 * GP:2 * GP]
            o_g = a[:, 2 * GP:3 * GP]
            g_g = a[:, 3 * GP:4 * GP]
            cst = f_g * cst + i_g * g_g
            h = o_g * jnp.tanh(cst)                      # (bb, 8)
            hs.append(h)
        # Blocked Flatten+FC1: pack 16 h_t's into one lane-dense (bb,128) slab
        # and do a single well-shaped K=128 matmul (off the recurrence path).
        hblk = jnp.concatenate(hs, axis=1)               # (bb, 128)
        acc = acc + jnp.dot(hblk, w1_c, preferred_element_type=jnp.float32)
        return h, cst, acc

    zeros_h = jnp.zeros((bb, GP), jnp.float32)
    acc0 = jnp.zeros((bb, FC1_OUT), jnp.float32)
    _, _, acc = jax.lax.fori_loop(0, n_chunks, chunk_body,
                                  (zeros_h, zeros_h, acc0))

    # fc tail: ReLU(acc + b1) @ W2^T + b2   (dropouts are identity at eval).
    h1 = jnp.maximum(acc + fc1b_ref[...], 0.0)
    out = (jnp.dot(h1, fc2w_ref[...], preferred_element_type=jnp.float32)
           + fc2b_ref[...])
    o_ref[...] = out.astype(o_ref.dtype)


def prepare_params(p):
    """One-time (outside the hot path) re-layout of PyTorch-convention params."""
    H, D, T, C = HIDDEN_DIM, INPUT_DIM, TIME_LENGTH, NUM_CLASSES
    GP = GATE_PAD
    assert H <= GP and D <= GP

    # Gate reorder: PyTorch order [i, f, g, o] -> kernel order [i, f, o, g]
    order = (0, 1, 3, 2)
    wih_t = jnp.zeros((D, GATES), jnp.float32)   # used by the hoisted x-proj
    whh = jnp.zeros((GP, GATES), jnp.float32)
    bias = jnp.zeros((GATES,), jnp.float32)
    b = p["b_ih"] + p["b_hh"]
    for n, g in enumerate(order):
        wih_t = wih_t.at[:, n * GP:n * GP + H].set(p["w_ih"][g * H:(g + 1) * H, :].T)
        whh = whh.at[:H, n * GP:n * GP + H].set(p["w_hh"][g * H:(g + 1) * H, :].T)
        bias = bias.at[n * GP:n * GP + H].set(b[g * H:(g + 1) * H])
    # NOTE: pad gate-lanes of wih_t/whh/bias MUST stay exactly zero (h/c pad
    # lanes then stay zero for the whole recurrence).

    # FC1: (128, T*H) -> per-chunk blocks (N_CHUNKS, CHUNK*GP=128, 128);
    # padded hidden lanes and padded timesteps get zero rows.
    fc1 = p["fc1_w"].T.reshape(T, H, FC1_OUT)
    fc1 = jnp.pad(fc1, ((0, T_PAD - T), (0, GP - H), (0, 0)))
    fc1 = fc1.reshape(N_CHUNKS, CHUNK * GP, FC1_OUT)
    fc1b = p["fc1_b"][None, :]

    # FC2: (C, 128) -> (128, 128) column-padded (lane-dense output slab).
    fc2 = jnp.pad(p["fc2_w"].T, ((0, 0), (0, FC1_OUT - C)))
    fc2b = jnp.pad(p["fc2_b"][None, :], ((0, 0), (0, FC1_OUT - C)))

    return {"wih_t": wih_t, "bias": bias, "whh": whh,
            "fc1w": fc1, "fc1b": fc1b, "fc2w": fc2, "fc2b": fc2b}


@jax.jit
def lstm_net_forward(x, prepped):
    """x: (B, T, D) f32. prepped: output of prepare_params."""
    B, T, D = x.shape
    assert T == TIME_LENGTH and D == INPUT_DIM
    nb = -(-B // BB)
    Bp = nb * BB

    # Hoisted input projection (bias folded in): one batched matmul over all
    # timesteps instead of 200 tiny in-loop matmuls.  (B, T, 32)
    xw = jnp.einsum("btd,dg->btg", x.astype(jnp.float32),
                    prepped["wih_t"]) + prepped["bias"]
    # Pad batch/time and re-layout lane-dense: (N_CHUNKS, Bp, CHUNK*32).
    xw = jnp.pad(xw, ((0, Bp - B), (0, T_PAD - T), (0, 0)))
    xw = xw.reshape(Bp, N_CHUNKS, CHUNK, GATES)
    xw = jnp.transpose(xw, (1, 0, 2, 3)).reshape(N_CHUNKS, Bp, CHUNK * GATES)

    kernel = functools.partial(_lstm_net_kernel,
                               n_chunks=N_CHUNKS, chunk=CHUNK, bb=BB)
    out_padded = pl.pallas_call(
        kernel,
        out_shape=jax.ShapeDtypeStruct((Bp, FC1_OUT), jnp.float32),
        grid_spec=pltpu.PrefetchScalarGridSpec(
            num_scalar_prefetch=0,
            grid=(nb,),                                   # batch blocks
            in_specs=[
                pl.BlockSpec((N_CHUNKS, BB, CHUNK * GATES), lambda b: (0, b, 0)),  # xw
                pl.BlockSpec((GATE_PAD, GATES), lambda b: (0, 0)),                 # W_hh^T
                pl.BlockSpec((N_CHUNKS, CHUNK * GATE_PAD, FC1_OUT),
                             lambda b: (0, 0, 0)),                                 # FC1 W
                pl.BlockSpec((1, FC1_OUT), lambda b: (0, 0)),                      # FC1 b
                pl.BlockSpec((FC1_OUT, FC1_OUT), lambda b: (0, 0)),                # FC2 W
                pl.BlockSpec((1, FC1_OUT), lambda b: (0, 0)),                      # FC2 b
            ],
            out_specs=pl.BlockSpec((BB, FC1_OUT), lambda b: (b, 0)),
        ),
        compiler_params=pltpu.CompilerParams(
            dimension_semantics=("parallel",),            # megacore over batch
        ),
    )(xw, prepped["whh"], prepped["fc1w"], prepped["fc1b"],
      prepped["fc2w"], prepped["fc2b"])

    return out_padded[:B, :NUM_CLASSES]


def init_params(key):
    """Deterministic init mimicking torch defaults (U[-1/sqrt(fan), +])."""
    H, D, T, C = HIDDEN_DIM, INPUT_DIM, TIME_LENGTH, NUM_CLASSES
    ks = jax.random.split(key, 8)
    lb = 1.0 / jnp.sqrt(H)
    p = {
        "w_ih": jax.random.uniform(ks[0], (4 * H, D), jnp.float32, -lb, lb),
        "w_hh": jax.random.uniform(ks[1], (4 * H, H), jnp.float32, -lb, lb),
        "b_ih": jax.random.uniform(ks[2], (4 * H,), jnp.float32, -lb, lb),
        "b_hh": jax.random.uniform(ks[3], (4 * H,), jnp.float32, -lb, lb),
    }
    b1 = 1.0 / jnp.sqrt(T * H)
    p["fc1_w"] = jax.random.uniform(ks[4], (FC1_OUT, T * H), jnp.float32, -b1, b1)
    p["fc1_b"] = jax.random.uniform(ks[5], (FC1_OUT,), jnp.float32, -b1, b1)
    b2 = 1.0 / jnp.sqrt(FC1_OUT)
    p["fc2_w"] = jax.random.uniform(ks[6], (C, FC1_OUT), jnp.float32, -b2, b2)
    p["fc2_b"] = jax.random.uniform(ks[7], (C,), jnp.float32, -b2, b2)
    return p


def reference_forward(x, p):
    """Pure-JAX reference matching PyTorch LSTM + fc (eval-mode dropout)."""
    B, T, D = x.shape
    H = HIDDEN_DIM
    w_ih, w_hh = p["w_ih"], p["w_hh"]
    b = p["b_ih"] + p["b_hh"]

    def step(carry, x_t):
        h, c = carry
        gates = x_t @ w_ih.T + h @ w_hh.T + b
        i = jax.nn.sigmoid(gates[:, 0 * H:1 * H])
        f = jax.nn.sigmoid(gates[:, 1 * H:2 * H])
        g = jnp.tanh(gates[:, 2 * H:3 * H])
        o = jax.nn.sigmoid(gates[:, 3 * H:4 * H])
        c = f * c + i * g
        h = o * jnp.tanh(c)
        return (h, c), h

    h0 = jnp.zeros((B, H), jnp.float32)
    _, hs = jax.lax.scan(step, (h0, h0), jnp.swapaxes(x, 0, 1))
    hs = jnp.swapaxes(hs, 0, 1)                      # (B, T, H)
    flat = hs.reshape(B, T * H)
    h1 = jnp.maximum(flat @ p["fc1_w"].T + p["fc1_b"], 0.0)
    return h1 @ p["fc2_w"].T + p["fc2_b"]


if __name__ == "__main__":
    key = jax.random.PRNGKey(0)
    k_x, k_p = jax.random.split(key)

    B = 2
    x = jax.random.normal(k_x, (B, TIME_LENGTH, INPUT_DIM), jnp.float32)
    params = init_params(k_p)
    prepped = prepare_params(params)   # one-time, hoisted out of the hot path

    out = lstm_net_forward(x, prepped)
    out = jax.block_until_ready(out)
    assert out.shape == (B, NUM_CLASSES), out.shape

    ref = reference_forward(x, params)
    assert jnp.allclose(out, ref, atol=2e-3, rtol=2e-3), (
        "mismatch vs pure-JAX reference, max abs err "
        f"{jnp.max(jnp.abs(out - ref))}")

    print("KERNEL_OK")
</pallas_src>

<mosaic_0001>
module attributes {stable_mosaic.version = 11 : i64} {
  func.func @_lstm_net_kernel(%arg0: i32, %arg1: memref<13x8x512xf32, #tpu.memory_space<vmem>>, %arg2: memref<8x32xf32, #tpu.memory_space<vmem>>, %arg3: memref<13x128x128xf32, #tpu.memory_space<vmem>>, %arg4: memref<1x128xf32, #tpu.memory_space<vmem>>, %arg5: memref<128x128xf32, #tpu.memory_space<vmem>>, %arg6: memref<1x128xf32, #tpu.memory_space<vmem>>, %arg7: memref<8x128xf32, #tpu.memory_space<vmem>>) attributes {dimension_semantics = [#tpu.dimension_semantics<parallel>], iteration_bounds = array<i64: 1>, scalar_prefetch = 0 : i64, scratch_operands = 0 : i64, tpu.core_type = #tpu.core_type<tc>, window_params = [{transform_indices = @transform_0, window_bounds = array<i64: 13, 8, 512>}, {pipeline_mode = #tpu.pipeline_mode<synchronous>, transform_indices = @transform_1, window_bounds = array<i64: 8, 32>}, {pipeline_mode = #tpu.pipeline_mode<synchronous>, transform_indices = @transform_2, window_bounds = array<i64: 13, 128, 128>}, {pipeline_mode = #tpu.pipeline_mode<synchronous>, transform_indices = @transform_3, window_bounds = array<i64: 1, 128>}, {pipeline_mode = #tpu.pipeline_mode<synchronous>, transform_indices = @transform_4, window_bounds = array<i64: 128, 128>}, {pipeline_mode = #tpu.pipeline_mode<synchronous>, transform_indices = @transform_5, window_bounds = array<i64: 1, 128>}, {transform_indices = @transform_6, window_bounds = array<i64: 8, 128>}]} {
    %c0 = arith.constant 0 : index
    %c0_0 = arith.constant 0 : index
    %0 = vector.load %arg2[%c0, %c0_0] : memref<8x32xf32, #tpu.memory_space<vmem>>, vector<8x32xf32>
    %1 = tpu.iota {dimensions = array<i32: 1>} : vector<8x32xi32>
    %c24_i32 = arith.constant 24 : i32
    %2 = vector.broadcast %c24_i32 : i32 to vector<8x32xi32>
    %3 = arith.cmpi slt, %1, %2 : vector<8x32xi32>
    %cst = arith.constant 0.000000e+00 : f32
    %4 = vector.broadcast %cst : f32 to vector<8x8xf32>
    %cst_1 = arith.constant 0.000000e+00 : f32
    %5 = vector.broadcast %cst_1 : f32 to vector<8x128xf32>
    %c0_i32 = arith.constant 0 : i32
    %c13_i32 = arith.constant 13 : i32
    %6 = arith.addi %c0_i32, %c13_i32 : i32
    %c1_i32 = arith.constant 1 : i32
    %7:3 = scf.for %arg8 = %c0_i32 to %6 step %c1_i32 iter_args(%arg9 = %4, %arg10 = %4, %arg11 = %5) -> (vector<8x8xf32>, vector<8x8xf32>, vector<8x128xf32>)  : i32 {
      %19 = arith.index_cast %arg8 : i32 to index
      %c0_13 = arith.constant 0 : index
      %c0_14 = arith.constant 0 : index
      %20 = vector.load %arg1[%19, %c0_13, %c0_14] : memref<13x8x512xf32, #tpu.memory_space<vmem>>, vector<1x8x512xf32>
      %21 = vector.shape_cast %20 : vector<1x8x512xf32> to vector<8x512xf32>
      %22 = arith.index_cast %arg8 : i32 to index
      %c0_15 = arith.constant 0 : index
      %c0_16 = arith.constant 0 : index
      %23 = vector.load %arg3[%22, %c0_15, %c0_16] : memref<13x128x128xf32, #tpu.memory_space<vmem>>, vector<1x128x128xf32>
      %24 = vector.shape_cast %23 : vector<1x128x128xf32> to vector<128x128xf32>
      %25 = vector.extract_strided_slice %21 {offsets = [0, 0], sizes = [8, 32], strides = [1, 1]} : vector<8x512xf32> to vector<8x32xf32>
      %cst_17 = arith.constant dense<0.000000e+00> : vector<8x32xf32>
      %26 = tpu.matmul %arg9, %0, %cst_17 {dimension_numbers = #tpu.dot_dimension_numbers<[1], [0], [0], [1], [0, 0, 1, 1], [], []>} : vector<8x8xf32>, vector<8x32xf32>, vector<8x32xf32> -> vector<8x32xf32>
      %27 = arith.addf %25, %26 : vector<8x32xf32>
      %cst_18 = arith.constant 5.000000e-01 : f32
      %28 = vector.broadcast %cst_18 : f32 to vector<8x32xf32>
      %29 = arith.mulf %28, %27 : vector<8x32xf32>
      %30 = arith.select %3, %29, %27 : vector<8x32xi1>, vector<8x32xf32>
      %31 = math.tanh %30 : vector<8x32xf32>
      %cst_19 = arith.constant 5.000000e-01 : f32
      %32 = vector.broadcast %cst_19 : f32 to vector<8x32xf32>
      %33 = arith.mulf %32, %31 : vector<8x32xf32>
      %cst_20 = arith.constant 5.000000e-01 : f32
      %34 = vector.broadcast %cst_20 : f32 to vector<8x32xf32>
      %35 = arith.addf %33, %34 : vector<8x32xf32>
      %36 = arith.select %3, %35, %31 : vector<8x32xi1>, vector<8x32xf32>
      %37 = vector.extract_strided_slice %36 {offsets = [0, 0], sizes = [8, 8], strides = [1, 1]} : vector<8x32xf32> to vector<8x8xf32>
      %38 = vector.extract_strided_slice %36 {offsets = [0, 8], sizes = [8, 8], strides = [1, 1]} : vector<8x32xf32> to vector<8x8xf32>
      %39 = vector.extract_strided_slice %36 {offsets = [0, 16], sizes = [8, 8], strides = [1, 1]} : vector<8x32xf32> to vector<8x8xf32>
      %40 = vector.extract_strided_slice %36 {offsets = [0, 24], sizes = [8, 8], strides = [1, 1]} : vector<8x32xf32> to vector<8x8xf32>
      %41 = arith.mulf %38, %arg10 : vector<8x8xf32>
      %42 = arith.mulf %37, %40 : vector<8x8xf32>
      %43 = arith.addf %41, %42 : vector<8x8xf32>
      %44 = math.tanh %43 : vector<8x8xf32>
      %45 = arith.mulf %39, %44 : vector<8x8xf32>
      %46 = vector.extract_strided_slice %21 {offsets = [0, 32], sizes = [8, 32], strides = [1, 1]} : vector<8x512xf32> to vector<8x32xf32>
      %cst_21 = arith.constant dense<0.000000e+00> : vector<8x32xf32>
      %47 = tpu.matmul %45, %0, %cst_21 {dimension_numbers = #tpu.dot_dimension_numbers<[1], [0], [0], [1], [0, 0, 1, 1], [], []>} : vector<8x8xf32>, vector<8x32xf32>, vector<8x32xf32> -> vector<8x32xf32>
      %48 = arith.addf %46, %47 : vector<8x32xf32>
      %cst_22 = arith.constant 5.000000e-01 : f32
      %49 = vector.broadcast %cst_22 : f32 to vector<8x32xf32>
      %50 = arith.mulf %49, %48 : vector<8x32xf32>
      %51 = arith.select %3, %50, %48 : vector<8x32xi1>, vector<8x32xf32>
      %52 = math.tanh %51 : vector<8x32xf32>
      %cst_23 = arith.constant 5.000000e-01 : f32
      %53 = vector.broadcast %cst_23 : f32 to vector<8x32xf32>
      %54 = arith.mulf %53, %52 : vector<8x32xf32>
      %cst_24 = arith.constant 5.000000e-01 : f32
      %55 = vector.broadcast %cst_24 : f32 to vector<8x32xf32>
      %56 = arith.addf %54, %55 : vector<8x32xf32>
      %57 = arith.select %3, %56, %52 : vector<8x32xi1>, vector<8x32xf32>
      %58 = vector.extract_strided_slice %57 {offsets = [0, 0], sizes = [8, 8], strides = [1, 1]} : vector<8x32xf32> to vector<8x8xf32>
      %59 = vector.extract_strided_slice %57 {offsets = [0, 8], sizes = [8, 8], strides = [1, 1]} : vector<8x32xf32> to vector<8x8xf32>
      %60 = vector.extract_strided_slice %57 {offsets = [0, 16], sizes = [8, 8], strides = [1, 1]} : vector<8x32xf32> to vector<8x8xf32>
      %61 = vector.extract_strided_slice %57 {offsets = [0, 24], sizes = [8, 8], strides = [1, 1]} : vector<8x32xf32> to vector<8x8xf32>
      %62 = arith.mulf %59, %43 : vector<8x8xf32>
      %63 = arith.mulf %58, %61 : vector<8x8xf32>
      %64 = arith.addf %62, %63 : vector<8x8xf32>
      %65 = math.tanh %64 : vector<8x8xf32>
      %66 = arith.mulf %60, %65 : vector<8x8xf32>
      %67 = vector.extract_strided_slice %21 {offsets = [0, 64], sizes = [8, 32], strides = [1, 1]} : vector<8x512xf32> to vector<8x32xf32>
      %cst_25 = arith.constant dense<0.000000e+00> : vector<8x32xf32>
      %68 = tpu.matmul %66, %0, %cst_25 {dimension_numbers = #tpu.dot_dimension_numbers<[1], [0], [0], [1], [0, 0, 1, 1], [], []>} : vector<8x8xf32>, vector<8x32xf32>, vector<8x32xf32> -> vector<8x32xf32>
      %69 = arith.addf %67, %68 : vector<8x32xf32>
      %cst_26 = arith.constant 5.000000e-01 : f32
      %70 = vector.broadcast %cst_26 : f32 to vector<8x32xf32>
      %71 = arith.mulf %70, %69 : vector<8x32xf32>
      %72 = arith.select %3, %71, %69 : vector<8x32xi1>, vector<8x32xf32>
      %73 = math.tanh %72 : vector<8x32xf32>
      %cst_27 = arith.constant 5.000000e-01 : f32
      %74 = vector.broadcast %cst_27 : f32 to vector<8x32xf32>
      %75 = arith.mulf %74, %73 : vector<8x32xf32>
      %cst_28 = arith.constant 5.000000e-01 : f32
      %76 = vector.broadcast %cst_28 : f32 to vector<8x32xf32>
      %77 = arith.addf %75, %76 : vector<8x32xf32>
      %78 = arith.select %3, %77, %73 : vector<8x32xi1>, vector<8x32xf32>
      %79 = vector.extract_strided_slice %78 {offsets = [0, 0], sizes = [8, 8], strides = [1, 1]} : vector<8x32xf32> to vector<8x8xf32>
      %80 = vector.extract_strided_slice %78 {offsets = [0, 8], sizes = [8, 8], strides = [1, 1]} : vector<8x32xf32> to vector<8x8xf32>
      %81 = vector.extract_strided_slice %78 {offsets = [0, 16], sizes = [8, 8], strides = [1, 1]} : vector<8x32xf32> to vector<8x8xf32>
      %82 = vector.extract_strided_slice %78 {offsets = [0, 24], sizes = [8, 8], strides = [1, 1]} : vector<8x32xf32> to vector<8x8xf32>
      %83 = arith.mulf %80, %64 : vector<8x8xf32>
      %84 = arith.mulf %79, %82 : vector<8x8xf32>
      %85 = arith.addf %83, %84 : vector<8x8xf32>
      %86 = math.tanh %85 : vector<8x8xf32>
      %87 = arith.mulf %81, %86 : vector<8x8xf32>
      %88 = vector.extract_strided_slice %21 {offsets = [0, 96], sizes = [8, 32], strides = [1, 1]} : vector<8x512xf32> to vector<8x32xf32>
      %cst_29 = arith.constant dense<0.000000e+00> : vector<8x32xf32>
      %89 = tpu.matmul %87, %0, %cst_29 {dimension_numbers = #tpu.dot_dimension_numbers<[1], [0], [0], [1], [0, 0, 1, 1], [], []>} : vector<8x8xf32>, vector<8x32xf32>, vector<8x32xf32> -> vector<8x32xf32>
      %90 = arith.addf %88, %89 : vector<8x32xf32>
      %cst_30 = arith.constant 5.000000e-01 : f32
      %91 = vector.broadcast %cst_30 : f32 to vector<8x32xf32>
      %92 = arith.mulf %91, %90 : vector<8x32xf32>
      %93 = arith.select %3, %92, %90 : vector<8x32xi1>, vector<8x32xf32>
      %94 = math.tanh %93 : vector<8x32xf32>
      %cst_31 = arith.constant 5.000000e-01 : f32
      %95 = vector.broadcast %cst_31 : f32 to vector<8x32xf32>
      %96 = arith.mulf %95, %94 : vector<8x32xf32>
      %cst_32 = arith.constant 5.000000e-01 : f32
      %97 = vector.broadcast %cst_32 : f32 to vector<8x32xf32>
      %98 = arith.addf %96, %97 : vector<8x32xf32>
      %99 = arith.select %3, %98, %94 : vector<8x32xi1>, vector<8x32xf32>
      %100 = vector.extract_strided_slice %99 {offsets = [0, 0], sizes = [8, 8], strides = [1, 1]} : vector<8x32xf32> to vector<8x8xf32>
      %101 = vector.extract_strided_slice %99 {offsets = [0, 8], sizes = [8, 8], strides = [1, 1]} : vector<8x32xf32> to vector<8x8xf32>
      %102 = vector.extract_strided_slice %99 {offsets = [0, 16], sizes = [8, 8], strides = [1, 1]} : vector<8x32xf32> to vector<8x8xf32>
      %103 = vector.extract_strided_slice %99 {offsets = [0, 24], sizes = [8, 8], strides = [1, 1]} : vector<8x32xf32> to vector<8x8xf32>
      %104 = arith.mulf %101, %85 : vector<8x8xf32>
      %105 = arith.mulf %100, %103 : vector<8x8xf32>
      %106 = arith.addf %104, %105 : vector<8x8xf32>
      %107 = math.tanh %106 : vector<8x8xf32>
      %108 = arith.mulf %102, %107 : vector<8x8xf32>
      %109 = vector.extract_strided_slice %21 {offsets = [0, 128], sizes = [8, 32], strides = [1, 1]} : vector<8x512xf32> to vector<8x32xf32>
      %cst_33 = arith.constant dense<0.000000e+00> : vector<8x32xf32>
      %110 = tpu.matmul %108, %0, %cst_33 {dimension_numbers = #tpu.dot_dimension_numbers<[1], [0], [0], [1], [0, 0, 1, 1], [], []>} : vector<8x8xf32>, vector<8x32xf32>, vector<8x32xf32> -> vector<8x32xf32>
      %111 = arith.addf %109, %110 : vector<8x32xf32>
      %cst_34 = arith.constant 5.000000e-01 : f32
      %112 = vector.broadcast %cst_34 : f32 to vector<8x32xf32>
      %113 = arith.mulf %112, %111 : vector<8x32xf32>
      %114 = arith.select %3, %113, %111 : vector<8x32xi1>, vector<8x32xf32>
      %115 = math.tanh %114 : vector<8x32xf32>
      %cst_35 = arith.constant 5.000000e-01 : f32
      %116 = vector.broadcast %cst_35 : f32 to vector<8x32xf32>
      %117 = arith.mulf %116, %115 : vector<8x32xf32>
      %cst_36 = arith.constant 5.000000e-01 : f32
      %118 = vector.broadcast %cst_36 : f32 to vector<8x32xf32>
      %119 = arith.addf %117, %118 : vector<8x32xf32>
      %120 = arith.select %3, %119, %115 : vector<8x32xi1>, vector<8x32xf32>
      %121 = vector.extract_strided_slice %120 {offsets = [0, 0], sizes = [8, 8], strides = [1, 1]} : vector<8x32xf32> to vector<8x8xf32>
      %122 = vector.extract_strided_slice %120 {offsets = [0, 8], sizes = [8, 8], strides = [1, 1]} : vector<8x32xf32> to vector<8x8xf32>
      %123 = vector.extract_strided_slice %120 {offsets = [0, 16], sizes = [8, 8], strides = [1, 1]} : vector<8x32xf32> to vector<8x8xf32>
      %124 = vector.extract_strided_slice %120 {offsets = [0, 24], sizes = [8, 8], strides = [1, 1]} : vector<8x32xf32> to vector<8x8xf32>
      %125 = arith.mulf %122, %106 : vector<8x8xf32>
      %126 = arith.mulf %121, %124 : vector<8x8xf32>
      %127 = arith.addf %125, %126 : vector<8x8xf32>
      %128 = math.tanh %127 : vector<8x8xf32>
      %129 = arith.mulf %123, %128 : vector<8x8xf32>
      %130 = vector.extract_strided_slice %21 {offsets = [0, 160], sizes = [8, 32], strides = [1, 1]} : vector<8x512xf32> to vector<8x32xf32>
      %cst_37 = arith.constant dense<0.000000e+00> : vector<8x32xf32>
      %131 = tpu.matmul %129, %0, %cst_37 {dimension_numbers = #tpu.dot_dimension_numbers<[1], [0], [0], [1], [0, 0, 1, 1], [], []>} : vector<8x8xf32>, vector<8x32xf32>, vector<8x32xf32> -> vector<8x32xf32>
      %132 = arith.addf %130, %131 : vector<8x32xf32>
      %cst_38 = arith.constant 5.000000e-01 : f32
      %133 = vector.broadcast %cst_38 : f32 to vector<8x32xf32>
      %134 = arith.mulf %133, %132 : vector<8x32xf32>
      %135 = arith.select %3, %134, %132 : vector<8x32xi1>, vector<8x32xf32>
      %136 = math.tanh %135 : vector<8x32xf32>
      %cst_39 = arith.constant 5.000000e-01 : f32
      %137 = vector.broadcast %cst_39 : f32 to vector<8x32xf32>
      %138 = arith.mulf %137, %136 : vector<8x32xf32>
      %cst_40 = arith.constant 5.000000e-01 : f32
      %139 = vector.broadcast %cst_40 : f32 to vector<8x32xf32>
      %140 = arith.addf %138, %139 : vector<8x32xf32>
      %141 = arith.select %3, %140, %136 : vector<8x32xi1>, vector<8x32xf32>
      %142 = vector.extract_strided_slice %141 {offsets = [0, 0], sizes = [8, 8], strides = [1, 1]} : vector<8x32xf32> to vector<8x8xf32>
      %143 = vector.extract_strided_slice %141 {offsets = [0, 8], sizes = [8, 8], strides = [1, 1]} : vector<8x32xf32> to vector<8x8xf32>
      %144 = vector.extract_strided_slice %141 {offsets = [0, 16], sizes = [8, 8], strides = [1, 1]} : vector<8x32xf32> to vector<8x8xf32>
      %145 = vector.extract_strided_slice %141 {offsets = [0, 24], sizes = [8, 8], strides = [1, 1]} : vector<8x32xf32> to vector<8x8xf32>
      %146 = arith.mulf %143, %127 : vector<8x8xf32>
      %147 = arith.mulf %142, %145 : vector<8x8xf32>
      %148 = arith.addf %146, %147 : vector<8x8xf32>
      %149 = math.tanh %148 : vector<8x8xf32>
      %150 = arith.mulf %144, %149 : vector<8x8xf32>
      %151 = vector.extract_strided_slice %21 {offsets = [0, 192], sizes = [8, 32], strides = [1, 1]} : vector<8x512xf32> to vector<8x32xf32>
      %cst_41 = arith.constant dense<0.000000e+00> : vector<8x32xf32>
      %152 = tpu.matmul %150, %0, %cst_41 {dimension_numbers = #tpu.dot_dimension_numbers<[1], [0], [0], [1], [0, 0, 1, 1], [], []>} : vector<8x8xf32>, vector<8x32xf32>, vector<8x32xf32> -> vector<8x32xf32>
      %153 = arith.addf %151, %152 : vector<8x32xf32>
      %cst_42 = arith.constant 5.000000e-01 : f32
      %154 = vector.broadcast %cst_42 : f32 to vector<8x32xf32>
      %155 = arith.mulf %154, %153 : vector<8x32xf32>
      %156 = arith.select %3, %155, %153 : vector<8x32xi1>, vector<8x32xf32>
      %157 = math.tanh %156 : vector<8x32xf32>
      %cst_43 = arith.constant 5.000000e-01 : f32
      %158 = vector.broadcast %cst_43 : f32 to vector<8x32xf32>
      %159 = arith.mulf %158, %157 : vector<8x32xf32>
      %cst_44 = arith.constant 5.000000e-01 : f32
      %160 = vector.broadcast %cst_44 : f32 to vector<8x32xf32>
      %161 = arith.addf %159, %160 : vector<8x32xf32>
      %162 = arith.select %3, %161, %157 : vector<8x32xi1>, vector<8x32xf32>
      %163 = vector.extract_strided_slice %162 {offsets = [0, 0], sizes = [8, 8], strides = [1, 1]} : vector<8x32xf32> to vector<8x8xf32>
      %164 = vector.extract_strided_slice %162 {offsets = [0, 8], sizes = [8, 8], strides = [1, 1]} : vector<8x32xf32> to vector<8x8xf32>
      %165 = vector.extract_strided_slice %162 {offsets = [0, 16], sizes = [8, 8], strides = [1, 1]} : vector<8x32xf32> to vector<8x8xf32>
      %166 = vector.extract_strided_slice %162 {offsets = [0, 24], sizes = [8, 8], strides = [1, 1]} : vector<8x32xf32> to vector<8x8xf32>
      %167 = arith.mulf %164, %148 : vector<8x8xf32>
      %168 = arith.mulf %163, %166 : vector<8x8xf32>
      %169 = arith.addf %167, %168 : vector<8x8xf32>
      %170 = math.tanh %169 : vector<8x8xf32>
      %171 = arith.mulf %165, %170 : vector<8x8xf32>
      %172 = vector.extract_strided_slice %21 {offsets = [0, 224], sizes = [8, 32], strides = [1, 1]} : vector<8x512xf32> to vector<8x32xf32>
      %cst_45 = arith.constant dense<0.000000e+00> : vector<8x32xf32>
      %173 = tpu.matmul %171, %0, %cst_45 {dimension_numbers = #tpu.dot_dimension_numbers<[1], [0], [0], [1], [0, 0, 1, 1], [], []>} : vector<8x8xf32>, vector<8x32xf32>, vector<8x32xf32> -> vector<8x32xf32>
      %174 = arith.addf %172, %173 : vector<8x32xf32>
      %cst_46 = arith.constant 5.000000e-01 : f32
      %175 = vector.broadcast %cst_46 : f32 to vector<8x32xf32>
      %176 = arith.mulf %175, %174 : vector<8x32xf32>
      %177 = arith.select %3, %176, %174 : vector<8x32xi1>, vector<8x32xf32>
      %178 = math.tanh %177 : vector<8x32xf32>
      %cst_47 = arith.constant 5.000000e-01 : f32
      %179 = vector.broadcast %cst_47 : f32 to vector<8x32xf32>
      %180 = arith.mulf %179, %178 : vector<8x32xf32>
      %cst_48 = arith.constant 5.000000e-01 : f32
      %181 = vector.broadcast %cst_48 : f32 to vector<8x32xf32>
      %182 = arith.addf %180, %181 : vector<8x32xf32>
      %183 = arith.select %3, %182, %178 : vector<8x32xi1>, vector<8x32xf32>
      %184 = vector.extract_strided_slice %183 {offsets = [0, 0], sizes = [8, 8], strides = [1, 1]} : vector<8x32xf32> to vector<8x8xf32>
      %185 = vector.extract_strided_slice %183 {offsets = [0, 8], sizes = [8, 8], strides = [1, 1]} : vector<8x32xf32> to vector<8x8xf32>
      %186 = vector.extract_strided_slice %183 {offsets = [0, 16], sizes = [8, 8], strides = [1, 1]} : vector<8x32xf32> to vector<8x8xf32>
      %187 = vector.extract_strided_slice %183 {offsets = [0, 24], sizes = [8, 8], strides = [1, 1]} : vector<8x32xf32> to vector<8x8xf32>
      %188 = arith.mulf %185, %169 : vector<8x8xf32>
      %189 = arith.mulf %184, %187 : vector<8x8xf32>
      %190 = arith.addf %188, %189 : vector<8x8xf32>
      %191 = math.tanh %190 : vector<8x8xf32>
      %192 = arith.mulf %186, %191 : vector<8x8xf32>
      %193 = vector.extract_strided_slice %21 {offsets = [0, 256], sizes = [8, 32], strides = [1, 1]} : vector<8x512xf32> to vector<8x32xf32>
      %cst_49 = arith.constant dense<0.000000e+00> : vector<8x32xf32>
      %194 = tpu.matmul %192, %0, %cst_49 {dimension_numbers = #tpu.dot_dimension_numbers<[1], [0], [0], [1], [0, 0, 1, 1], [], []>} : vector<8x8xf32>, vector<8x32xf32>, vector<8x32xf32> -> vector<8x32xf32>
      %195 = arith.addf %193, %194 : vector<8x32xf32>
      %cst_50 = arith.constant 5.000000e-01 : f32
      %196 = vector.broadcast %cst_50 : f32 to vector<8x32xf32>
      %197 = arith.mulf %196, %195 : vector<8x32xf32>
      %198 = arith.select %3, %197, %195 : vector<8x32xi1>, vector<8x32xf32>
      %199 = math.tanh %198 : vector<8x32xf32>
      %cst_51 = arith.constant 5.000000e-01 : f32
      %200 = vector.broadcast %cst_51 : f32 to vector<8x32xf32>
      %201 = arith.mulf %200, %199 : vector<8x32xf32>
      %cst_52 = arith.constant 5.000000e-01 : f32
      %202 = vector.broadcast %cst_52 : f32 to vector<8x32xf32>
      %203 = arith.addf %201, %202 : vector<8x32xf32>
      %204 = arith.select %3, %203, %199 : vector<8x32xi1>, vector<8x32xf32>
      %205 = vector.extract_strided_slice %204 {offsets = [0, 0], sizes = [8, 8], strides = [1, 1]} : vector<8x32xf32> to vector<8x8xf32>
      %206 = vector.extract_strided_slice %204 {offsets = [0, 8], sizes = [8, 8], strides = [1, 1]} : vector<8x32xf32> to vector<8x8xf32>
      %207 = vector.extract_strided_slice %204 {offsets = [0, 16], sizes = [8, 8], strides = [1, 1]} : vector<8x32xf32> to vector<8x8xf32>
      %208 = vector.extract_strided_slice %204 {offsets = [0, 24], sizes = [8, 8], strides = [1, 1]} : vector<8x32xf32> to vector<8x8xf32>
      %209 = arith.mulf %206, %190 : vector<8x8xf32>
      %210 = arith.mulf %205, %208 : vector<8x8xf32>
      %211 = arith.addf %209, %210 : vector<8x8xf32>
      %212 = math.tanh %211 : vector<8x8xf32>
      %213 = arith.mulf %207, %212 : vector<8x8xf32>
      %214 = vector.extract_strided_slice %21 {offsets = [0, 288], sizes = [8, 32], strides = [1, 1]} : vector<8x512xf32> to vector<8x32xf32>
      %cst_53 = arith.constant dense<0.000000e+00> : vector<8x32xf32>
      %215 = tpu.matmul %213, %0, %cst_53 {dimension_numbers = #tpu.dot_dimension_numbers<[1], [0], [0], [1], [0, 0, 1, 1], [], []>} : vector<8x8xf32>, vector<8x32xf32>, vector<8x32xf32> -> vector<8x32xf32>
      %216 = arith.addf %214, %215 : vector<8x32xf32>
      %cst_54 = arith.constant 5.000000e-01 : f32
      %217 = vector.broadcast %cst_54 : f32 to vector<8x32xf32>
      %218 = arith.mulf %217, %216 : vector<8x32xf32>
      %219 = arith.select %3, %218, %216 : vector<8x32xi1>, vector<8x32xf32>
      %220 = math.tanh %219 : vector<8x32xf32>
      %cst_55 = arith.constant 5.000000e-01 : f32
      %221 = vector.broadcast %cst_55 : f32 to vector<8x32xf32>
      %222 = arith.mulf %221, %220 : vector<8x32xf32>
      %cst_56 = arith.constant 5.000000e-01 : f32
      %223 = vector.broadcast %cst_56 : f32 to vector<8x32xf32>
      %224 = arith.addf %222, %223 : vector<8x32xf32>
      %225 = arith.select %3, %224, %220 : vector<8x32xi1>, vector<8x32xf32>
      %226 = vector.extract_strided_slice %225 {offsets = [0, 0], sizes = [8, 8], strides = [1, 1]} : vector<8x32xf32> to vector<8x8xf32>
      %227 = vector.extract_strided_slice %225 {offsets = [0, 8], sizes = [8, 8], strides = [1, 1]} : vector<8x32xf32> to vector<8x8xf32>
      %228 = vector.extract_strided_slice %225 {offsets = [0, 16], sizes = [8, 8], strides = [1, 1]} : vector<8x32xf32> to vector<8x8xf32>
      %229 = vector.extract_strided_slice %225 {offsets = [0, 24], sizes = [8, 8], strides = [1, 1]} : vector<8x32xf32> to vector<8x8xf32>
      %230 = arith.mulf %227, %211 : vector<8x8xf32>
      %231 = arith.mulf %226, %229 : vector<8x8xf32>
      %232 = arith.addf %230, %231 : vector<8x8xf32>
      %233 = math.tanh %232 : vector<8x8xf32>
      %234 = arith.mulf %228, %233 : vector<8x8xf32>
      %235 = vector.extract_strided_slice %21 {offsets = [0, 320], sizes = [8, 32], strides = [1, 1]} : vector<8x512xf32> to vector<8x32xf32>
      %cst_57 = arith.constant dense<0.000000e+00> : vector<8x32xf32>
      %236 = tpu.matmul %234, %0, %cst_57 {dimension_numbers = #tpu.dot_dimension_numbers<[1], [0], [0], [1], [0, 0, 1, 1], [], []>} : vector<8x8xf32>, vector<8x32xf32>, vector<8x32xf32> -> vector<8x32xf32>
      %237 = arith.addf %235, %236 : vector<8x32xf32>
      %cst_58 = arith.constant 5.000000e-01 : f32
      %238 = vector.broadcast %cst_58 : f32 to vector<8x32xf32>
      %239 = arith.mulf %238, %237 : vector<8x32xf32>
      %240 = arith.select %3, %239, %237 : vector<8x32xi1>, vector<8x32xf32>
      %241 = math.tanh %240 : vector<8x32xf32>
      %cst_59 = arith.constant 5.000000e-01 : f32
      %242 = vector.broadcast %cst_59 : f32 to vector<8x32xf32>
      %243 = arith.mulf %242, %241 : vector<8x32xf32>
      %cst_60 = arith.constant 5.000000e-01 : f32
      %244 = vector.broadcast %cst_60 : f32 to vector<8x32xf32>
      %245 = arith.addf %243, %244 : vector<8x32xf32>
      %246 = arith.select %3, %245, %241 : vector<8x32xi1>, vector<8x32xf32>
      %247 = vector.extract_strided_slice %246 {offsets = [0, 0], sizes = [8, 8], strides = [1, 1]} : vector<8x32xf32> to vector<8x8xf32>
      %248 = vector.extract_strided_slice %246 {offsets = [0, 8], sizes = [8, 8], strides = [1, 1]} : vector<8x32xf32> to vector<8x8xf32>
      %249 = vector.extract_strided_slice %246 {offsets = [0, 16], sizes = [8, 8], strides = [1, 1]} : vector<8x32xf32> to vector<8x8xf32>
      %250 = vector.extract_strided_slice %246 {offsets = [0, 24], sizes = [8, 8], strides = [1, 1]} : vector<8x32xf32> to vector<8x8xf32>
      %251 = arith.mulf %248, %232 : vector<8x8xf32>
      %252 = arith.mulf %247, %250 : vector<8x8xf32>
      %253 = arith.addf %251, %252 : vector<8x8xf32>
      %254 = math.tanh %253 : vector<8x8xf32>
      %255 = arith.mulf %249, %254 : vector<8x8xf32>
      %256 = vector.extract_strided_slice %21 {offsets = [0, 352], sizes = [8, 32], strides = [1, 1]} : vector<8x512xf32> to vector<8x32xf32>
      %cst_61 = arith.constant dense<0.000000e+00> : vector<8x32xf32>
      %257 = tpu.matmul %255, %0, %cst_61 {dimension_numbers = #tpu.dot_dimension_numbers<[1], [0], [0], [1], [0, 0, 1, 1], [], []>} : vector<8x8xf32>, vector<8x32xf32>, vector<8x32xf32> -> vector<8x32xf32>
      %258 = arith.addf %256, %257 : vector<8x32xf32>
      %cst_62 = arith.constant 5.000000e-01 : f32
      %259 = vector.broadcast %cst_62 : f32 to vector<8x32xf32>
      %260 = arith.mulf %259, %258 : vector<8x32xf32>
      %261 = arith.select %3, %260, %258 : vector<8x32xi1>, vector<8x32xf32>
      %262 = math.tanh %261 : vector<8x32xf32>
      %cst_63 = arith.constant 5.000000e-01 : f32
      %263 = vector.broadcast %cst_63 : f32 to vector<8x32xf32>
      %264 = arith.mulf %263, %262 : vector<8x32xf32>
      %cst_64 = arith.constant 5.000000e-01 : f32
      %265 = vector.broadcast %cst_64 : f32 to vector<8x32xf32>
      %266 = arith.addf %264, %265 : vector<8x32xf32>
      %267 = arith.select %3, %266, %262 : vector<8x32xi1>, vector<8x32xf32>
      %268 = vector.extract_strided_slice %267 {offsets = [0, 0], sizes = [8, 8], strides = [1, 1]} : vector<8x32xf32> to vector<8x8xf32>
      %269 = vector.extract_strided_slice %267 {offsets = [0, 8], sizes = [8, 8], strides = [1, 1]} : vector<8x32xf32> to vector<8x8xf32>
      %270 = vector.extract_strided_slice %267 {offsets = [0, 16], sizes = [8, 8], strides = [1, 1]} : vector<8x32xf32> to vector<8x8xf32>
      %271 = vector.extract_strided_slice %267 {offsets = [0, 24], sizes = [8, 8], strides = [1, 1]} : vector<8x32xf32> to vector<8x8xf32>
      %272 = arith.mulf %269, %253 : vector<8x8xf32>
      %273 = arith.mulf %268, %271 : vector<8x8xf32>
      %274 = arith.addf %272, %273 : vector<8x8xf32>
      %275 = math.tanh %274 : vector<8x8xf32>
      %276 = arith.mulf %270, %275 : vector<8x8xf32>
      %277 = vector.extract_strided_slice %21 {offsets = [0, 384], sizes = [8, 32], strides = [1, 1]} : vector<8x512xf32> to vector<8x32xf32>
      %cst_65 = arith.constant dense<0.000000e+00> : vector<8x32xf32>
      %278 = tpu.matmul %276, %0, %cst_65 {dimension_numbers = #tpu.dot_dimension_numbers<[1], [0], [0], [1], [0, 0, 1, 1], [], []>} : vector<8x8xf32>, vector<8x32xf32>, vector<8x32xf32> -> vector<8x32xf32>
      %279 = arith.addf %277, %278 : vector<8x32xf32>
      %cst_66 = arith.constant 5.000000e-01 : f32
      %280 = vector.broadcast %cst_66 : f32 to vector<8x32xf32>
      %281 = arith.mulf %280, %279 : vector<8x32xf32>
      %282 = arith.select %3, %281, %279 : vector<8x32xi1>, vector<8x32xf32>
      %283 = math.tanh %282 : vector<8x32xf32>
      %cst_67 = arith.constant 5.000000e-01 : f32
      %284 = vector.broadcast %cst_67 : f32 to vector<8x32xf32>
      %285 = arith.mulf %284, %283 : vector<8x32xf32>
      %cst_68 = arith.constant 5.000000e-01 : f32
      %286 = vector.broadcast %cst_68 : f32 to vector<8x32xf32>
      %287 = arith.addf %285, %286 : vector<8x32xf32>
      %288 = arith.select %3, %287, %283 : vector<8x32xi1>, vector<8x32xf32>
      %289 = vector.extract_strided_slice %288 {offsets = [0, 0], sizes = [8, 8], strides = [1, 1]} : vector<8x32xf32> to vector<8x8xf32>
      %290 = vector.extract_strided_slice %288 {offsets = [0, 8], sizes = [8, 8], strides = [1, 1]} : vector<8x32xf32> to vector<8x8xf32>
      %291 = vector.extract_strided_slice %288 {offsets = [0, 16], sizes = [8, 8], strides = [1, 1]} : vector<8x32xf32> to vector<8x8xf32>
      %292 = vector.extract_strided_slice %288 {offsets = [0, 24], sizes = [8, 8], strides = [1, 1]} : vector<8x32xf32> to vector<8x8xf32>
      %293 = arith.mulf %290, %274 : vector<8x8xf32>
      %294 = arith.mulf %289, %292 : vector<8x8xf32>
      %295 = arith.addf %293, %294 : vector<8x8xf32>
      %296 = math.tanh %295 : vector<8x8xf32>
      %297 = arith.mulf %291, %296 : vector<8x8xf32>
      %298 = vector.extract_strided_slice %21 {offsets = [0, 416], sizes = [8, 32], strides = [1, 1]} : vector<8x512xf32> to vector<8x32xf32>
      %cst_69 = arith.constant dense<0.000000e+00> : vector<8x32xf32>
      %299 = tpu.matmul %297, %0, %cst_69 {dimension_numbers = #tpu.dot_dimension_numbers<[1], [0], [0], [1], [0, 0, 1, 1], [], []>} : vector<8x8xf32>, vector<8x32xf32>, vector<8x32xf32> -> vector<8x32xf32>
      %300 = arith.addf %298, %299 : vector<8x32xf32>
      %cst_70 = arith.constant 5.000000e-01 : f32
      %301 = vector.broadcast %cst_70 : f32 to vector<8x32xf32>
      %302 = arith.mulf %301, %300 : vector<8x32xf32>
      %303 = arith.select %3, %302, %300 : vector<8x32xi1>, vector<8x32xf32>
      %304 = math.tanh %303 : vector<8x32xf32>
      %cst_71 = arith.constant 5.000000e-01 : f32
      %305 = vector.broadcast %cst_71 : f32 to vector<8x32xf32>
      %306 = arith.mulf %305, %304 : vector<8x32xf32>
      %cst_72 = arith.constant 5.000000e-01 : f32
      %307 = vector.broadcast %cst_72 : f32 to vector<8x32xf32>
      %308 = arith.addf %306, %307 : vector<8x32xf32>
      %309 = arith.select %3, %308, %304 : vector<8x32xi1>, vector<8x32xf32>
      %310 = vector.extract_strided_slice %309 {offsets = [0, 0], sizes = [8, 8], strides = [1, 1]} : vector<8x32xf32> to vector<8x8xf32>
      %311 = vector.extract_strided_slice %309 {offsets = [0, 8], sizes = [8, 8], strides = [1, 1]} : vector<8x32xf32> to vector<8x8xf32>
      %312 = vector.extract_strided_slice %309 {offsets = [0, 16], sizes = [8, 8], strides = [1, 1]} : vector<8x32xf32> to vector<8x8xf32>
      %313 = vector.extract_strided_slice %309 {offsets = [0, 24], sizes = [8, 8], strides = [1, 1]} : vector<8x32xf32> to vector<8x8xf32>
      %314 = arith.mulf %311, %295 : vector<8x8xf32>
      %315 = arith.mulf %310, %313 : vector<8x8xf32>
      %316 = arith.addf %314, %315 : vector<8x8xf32>
      %317 = math.tanh %316 : vector<8x8xf32>
      %318 = arith.mulf %312, %317 : vector<8x8xf32>
      %319 = vector.extract_strided_slice %21 {offsets = [0, 448], sizes = [8, 32], strides = [1, 1]} : vector<8x512xf32> to vector<8x32xf32>
      %cst_73 = arith.constant dense<0.000000e+00> : vector<8x32xf32>
      %320 = tpu.matmul %318, %0, %cst_73 {dimension_numbers = #tpu.dot_dimension_numbers<[1], [0], [0], [1], [0, 0, 1, 1], [], []>} : vector<8x8xf32>, vector<8x32xf32>, vector<8x32xf32> -> vector<8x32xf32>
      %321 = arith.addf %319, %320 : vector<8x32xf32>
      %cst_74 = arith.constant 5.000000e-01 : f32
      %322 = vector.broadcast %cst_74 : f32 to vector<8x32xf32>
      %323 = arith.mulf %322, %321 : vector<8x32xf32>
      %324 = arith.select %3, %323, %321 : vector<8x32xi1>, vector<8x32xf32>
      %325 = math.tanh %324 : vector<8x32xf32>
      %cst_75 = arith.constant 5.000000e-01 : f32
      %326 = vector.broadcast %cst_75 : f32 to vector<8x32xf32>
      %327 = arith.mulf %326, %325 : vector<8x32xf32>
      %cst_76 = arith.constant 5.000000e-01 : f32
      %328 = vector.broadcast %cst_76 : f32 to vector<8x32xf32>
      %329 = arith.addf %327, %328 : vector<8x32xf32>
      %330 = arith.select %3, %329, %325 : vector<8x32xi1>, vector<8x32xf32>
      %331 = vector.extract_strided_slice %330 {offsets = [0, 0], sizes = [8, 8], strides = [1, 1]} : vector<8x32xf32> to vector<8x8xf32>
      %332 = vector.extract_strided_slice %330 {offsets = [0, 8], sizes = [8, 8], strides = [1, 1]} : vector<8x32xf32> to vector<8x8xf32>
      %333 = vector.extract_strided_slice %330 {offsets = [0, 16], sizes = [8, 8], strides = [1, 1]} : vector<8x32xf32> to vector<8x8xf32>
      %334 = vector.extract_strided_slice %330 {offsets = [0, 24], sizes = [8, 8], strides = [1, 1]} : vector<8x32xf32> to vector<8x8xf32>
      %335 = arith.mulf %332, %316 : vector<8x8xf32>
      %336 = arith.mulf %331, %334 : vector<8x8xf32>
      %337 = arith.addf %335, %336 : vector<8x8xf32>
      %338 = math.tanh %337 : vector<8x8xf32>
      %339 = arith.mulf %333, %338 : vector<8x8xf32>
      %340 = vector.extract_strided_slice %21 {offsets = [0, 480], sizes = [8, 32], strides = [1, 1]} : vector<8x512xf32> to vector<8x32xf32>
      %cst_77 = arith.constant dense<0.000000e+00> : vector<8x32xf32>
      %341 = tpu.matmul %339, %0, %cst_77 {dimension_numbers = #tpu.dot_dimension_numbers<[1], [0], [0], [1], [0, 0, 1, 1], [], []>} : vector<8x8xf32>, vector<8x32xf32>, vector<8x32xf32> -> vector<8x32xf32>
      %342 = arith.addf %340, %341 : vector<8x32xf32>
      %cst_78 = arith.constant 5.000000e-01 : f32
      %343 = vector.broadcast %cst_78 : f32 to vector<8x32xf32>
      %344 = arith.mulf %343, %342 : vector<8x32xf32>
      %345 = arith.select %3, %344, %342 : vector<8x32xi1>, vector<8x32xf32>
      %346 = math.tanh %345 : vector<8x32xf32>
      %cst_79 = arith.constant 5.000000e-01 : f32
      %347 = vector.broadcast %cst_79 : f32 to vector<8x32xf32>
      %348 = arith.mulf %347, %346 : vector<8x32xf32>
      %cst_80 = arith.constant 5.000000e-01 : f32
      %349 = vector.broadcast %cst_80 : f32 to vector<8x32xf32>
      %350 = arith.addf %348, %349 : vector<8x32xf32>
      %351 = arith.select %3, %350, %346 : vector<8x32xi1>, vector<8x32xf32>
      %352 = vector.extract_strided_slice %351 {offsets = [0, 0], sizes = [8, 8], strides = [1, 1]} : vector<8x32xf32> to vector<8x8xf32>
      %353 = vector.extract_strided_slice %351 {offsets = [0, 8], sizes = [8, 8], strides = [1, 1]} : vector<8x32xf32> to vector<8x8xf32>
      %354 = vector.extract_strided_slice %351 {offsets = [0, 16], sizes = [8, 8], strides = [1, 1]} : vector<8x32xf32> to vector<8x8xf32>
      %355 = vector.extract_strided_slice %351 {offsets = [0, 24], sizes = [8, 8], strides = [1, 1]} : vector<8x32xf32> to vector<8x8xf32>
      %356 = arith.mulf %353, %337 : vector<8x8xf32>
      %357 = arith.mulf %352, %355 : vector<8x8xf32>
      %358 = arith.addf %356, %357 : vector<8x8xf32>
      %359 = math.tanh %358 : vector<8x8xf32>
      %360 = arith.mulf %354, %359 : vector<8x8xf32>
      %361 = tpu.concatenate %45, %66, %87, %108, %129, %150, %171, %192, %213, %234, %255, %276, %297, %318, %339, %360 in 1 : vector<8x8xf32>, vector<8x8xf32>, vector<8x8xf32>, vector<8x8xf32>, vector<8x8xf32>, vector<8x8xf32>, vector<8x8xf32>, vector<8x8xf32>, vector<8x8xf32>, vector<8x8xf32>, vector<8x8xf32>, vector<8x8xf32>, vector<8x8xf32>, vector<8x8xf32>, vector<8x8xf32>, vector<8x8xf32> -> vector<8x128xf32>
      %cst_81 = arith.constant dense<0.000000e+00> : vector<8x128xf32>
      %362 = tpu.matmul %361, %24, %cst_81 {dimension_numbers = #tpu.dot_dimension_numbers<[1], [0], [0], [1], [0, 0, 1, 1], [], []>} : vector<8x128xf32>, vector<128x128xf32>, vector<8x128xf32> -> vector<8x128xf32>
      %363 = arith.addf %arg11, %362 : vector<8x128xf32>
      scf.yield %360, %358, %363 : vector<8x8xf32>, vector<8x8xf32>, vector<8x128xf32>
    }
    %c13_i32_2 = arith.constant 13 : i32
    %c0_3 = arith.constant 0 : index
    %c0_4 = arith.constant 0 : index
    %8 = vector.load %arg4[%c0_3, %c0_4] : memref<1x128xf32, #tpu.memory_space<vmem>>, vector<1x128xf32>
    %9 = vector.broadcast %8 : vector<1x128xf32> to vector<8x128xf32>
    %10 = arith.addf %7#2, %9 : vector<8x128xf32>
    %cst_5 = arith.constant 0.000000e+00 : f32
    %11 = vector.broadcast %cst_5 : f32 to vector<8x128xf32>
    %12 = arith.maximumf %10, %11 : vector<8x128xf32>
    %c0_6 = arith.constant 0 : index
    %c0_7 = arith.constant 0 : index
    %13 = vector.load %arg5[%c0_6, %c0_7] : memref<128x128xf32, #tpu.memory_space<vmem>>, vector<128x128xf32>
    %cst_8 = arith.constant dense<0.000000e+00> : vector<8x128xf32>
    %14 = tpu.matmul %12, %13, %cst_8 {dimension_numbers = #tpu.dot_dimension_numbers<[1], [0], [0], [1], [0, 0, 1, 1], [], []>} : vector<8x128xf32>, vector<128x128xf32>, vector<8x128xf32> -> vector<8x128xf32>
    %c0_9 = arith.constant 0 : index
    %c0_10 = arith.constant 0 : index
    %15 = vector.load %arg6[%c0_9, %c0_10] : memref<1x128xf32, #tpu.memory_space<vmem>>, vector<1x128xf32>
    %16 = vector.broadcast %15 : vector<1x128xf32> to vector<8x128xf32>
    %17 = arith.addf %14, %16 : vector<8x128xf32>
    %c0_11 = arith.constant 0 : index
    %c0_12 = arith.constant 0 : index
    %18 = vector.load %arg7[%c0_11, %c0_12] : memref<8x128xf32, #tpu.memory_space<vmem>>, vector<8x128xf32>
    tpu.vector_store %arg7[%c0_11, %c0_12], %17 {strides = array<i32>} : memref<8x128xf32, #tpu.memory_space<vmem>>, vector<8x128xf32>,
    return
  }
  func.func @transform_0(%arg0: i32) -> (i32, i32, i32) {
    %c0_i32 = arith.constant 0 : i32
    %c0_i32_0 = arith.constant 0 : i32
    %c0_i32_1 = arith.constant 0 : i32
    return %c0_i32, %arg0, %c0_i32_0 : i32, i32, i32
  }
  func.func @transform_1(%arg0: i32) -> (i32, i32) {
    %c0_i32 = arith.constant 0 : i32
    %c0_i32_0 = arith.constant 0 : i32
    %c0_i32_1 = arith.constant 0 : i32
    return %c0_i32, %c0_i32_0 : i32, i32
  }
  func.func @transform_2(%arg0: i32) -> (i32, i32, i32) {
    %c0_i32 = arith.constant 0 : i32
    %c0_i32_0 = arith.constant 0 : i32
    %c0_i32_1 = arith.constant 0 : i32
    %c0_i32_2 = arith.constant 0 : i32
    return %c0_i32, %c0_i32_0, %c0_i32_1 : i32, i32, i32
  }
  func.func @transform_3(%arg0: i32) -> (i32, i32) {
    %c0_i32 = arith.constant 0 : i32
    %c0_i32_0 = arith.constant 0 : i32
    %c0_i32_1 = arith.constant 0 : i32
    return %c0_i32, %c0_i32_0 : i32, i32
  }
  func.func @transform_4(%arg0: i32) -> (i32, i32) {
    %c0_i32 = arith.constant 0 : i32
    %c0_i32_0 = arith.constant 0 : i32
    %c0_i32_1 = arith.constant 0 : i32
    return %c0_i32, %c0_i32_0 : i32, i32
  }
  func.func @transform_5(%arg0: i32) -> (i32, i32) {
    %c0_i32 = arith.constant 0 : i32
    %c0_i32_0 = arith.constant 0 : i32
    %c0_i32_1 = arith.constant 0 : i32
    return %c0_i32, %c0_i32_0 : i32, i32
  }
  func.func @transform_6(%arg0: i32) -> (i32, i32) {
    %c0_i32 = arith.constant 0 : i32
    %c0_i32_0 = arith.constant 0 : i32
    return %arg0, %c0_i32 : i32, i32
  }
}

</mosaic_0001>

<llo_original>
// kernel: lstm_net_forward.1
$region0: #{lstm_net_forward.1}
  #allocation0 [shape = 'u32[]', space=smem, size = 0x4, offset = 0x4, fixed_abs, tag = 'smem constant byte address 0x4 - core index']
  #allocation1 [shape = 'u32[144,128]{1,0:T(1,128)}', space=vmem, size = 0x12000, scoped, tag = 'internal scratch']
  %s0 = inlined_call_operand.vmem [shape: f32[13,8,512], index: 0, kind: input, shape index: {}]
  %s1 = inlined_call_operand.vmem [shape: f32[8,32], index: 1, kind: input, shape index: {}]
  %s2 = inlined_call_operand.vmem [shape: f32[13,128,128], index: 2, kind: input, shape index: {}]
  %s3 = inlined_call_operand.vmem [shape: f32[1,128], index: 3, kind: input, shape index: {}]
  %s4 = inlined_call_operand.vmem [shape: f32[128,128], index: 4, kind: input, shape index: {}]
  %s5 = inlined_call_operand.vmem [shape: f32[1,128], index: 5, kind: input, shape index: {}]
  %s6 = inlined_call_operand.vmem [shape: f32[8,128], index: 6, kind: output, shape index: {}]
  %s7 = sld [smem:[#allocation0]]
  $region41: #{lstm_net_forward.1} parent=0
    _
  %s9 = ssub.s32 1, %s7
  %s10 = scalar_select 0, %s9, %s7
  // Predicated region
  $region2: #{lstm_net_forward.1} parent=0 // pred_check
    _
  $region3: #{lstm_net_forward.1} parent=0 // pred_check_branch
    %12 = sbr.rel (0) target = $region5
  $region4: #{lstm_net_forward.1} parent=0 // pred_region
    _
  $region5: #{lstm_net_forward.1} parent=0 // pred_fallthru
    _
  // Predicated region
  $region6: #{lstm_net_forward.1} parent=0 // pred_check
    _
  $region7: #{lstm_net_forward.1} parent=0 // pred_check_branch
    %14 = sbr.rel (0) target = $region9
  $region8: #{lstm_net_forward.1} parent=0 // pred_region
    _
  $region9: #{lstm_net_forward.1} parent=0 // pred_fallthru
    _
  // Predicated region
  $region10: #{lstm_net_forward.1} parent=0 // pred_check
    _
  $region11: #{lstm_net_forward.1} parent=0 // pred_check_branch
    %16 = sbr.rel (0) target = $region13
  $region12: #{lstm_net_forward.1} parent=0 // pred_region
    _
  $region13: #{lstm_net_forward.1} parent=0 // pred_fallthru
    _
  // Predicated region
  $region14: #{lstm_net_forward.1} parent=0 // pred_check
    _
  $region15: #{lstm_net_forward.1} parent=0 // pred_check_branch
    %18 = sbr.rel (0) target = $region17
  $region16: #{lstm_net_forward.1} parent=0 // pred_region
    _
  $region17: #{lstm_net_forward.1} parent=0 // pred_fallthru
    _
  // Predicated region
  $region18: #{lstm_net_forward.1} parent=0 // pred_check
    _
  $region19: #{lstm_net_forward.1} parent=0 // pred_check_branch
    %20 = sbr.rel (0) target = $region21
  $region20: #{lstm_net_forward.1} parent=0 // pred_region
    _
  $region21: #{lstm_net_forward.1} parent=0 // pred_fallthru
    _
  // Predicated region
  $region22: #{lstm_net_forward.1} parent=0 // pred_check
    _
  $region23: #{lstm_net_forward.1} parent=0 // pred_check_branch
    %22 = sbr.rel (0) target = $region25
  $region24: #{lstm_net_forward.1} parent=0 // pred_region
    _
  $region25: #{lstm_net_forward.1} parent=0 // pred_fallthru
    _
  %v23 = vld [vmem:[%s1] sm:$0xff]
  %v24 = vlaneseq
  %v25 = vand.u32 %v24, 127
  %vm26 = vcmp.lt.s32.totalorder %v25, 24
  loop: start=0, step=1, limit=13
  $region26: #{lstm_net_forward.1} parent=0 // loop_pre_header
    _
  $region27: #{lstm_net_forward.1} parent=0 // loop_header
    %s28 = sphi 0, %s32
    %p29 = scmp.ge.s32.totalorder %s28, 13
    %v33 = vphi 0.0, %v1789
    %v34 = vphi 0.0, %v1783
    %v35 = vphi 0.0, %v1933
  $region28: #{lstm_net_forward.1} parent=0 // loop_header_branch
    %31 = sbr.rel (%p29) target = $region32
  $region29: #{lstm_net_forward.1} parent=0 // loop_body
    %s36 = smul.u32 %s28, 4
    %s37 = smul.addr %s36, 8
    %s38 = scalar_lea.vmem %s0, %s37
    %v39 = vld [vmem:[%s38] sm:$0xff]
    %v40 = vld [vmem:[%s38 + $0x8] sm:$0xff]
    %v41 = vld [vmem:[%s38 + $0x10] sm:$0xff]
    %v42 = vld [vmem:[%s38 + $0x18] sm:$0xff]
    %s43 = smul.u32 %s28, 128
    %s44 = scalar_lea.vmem %s2, %s43
    %v45 = vld [vmem:[%s44] sm:$0xff]
    %v46 = vld [vmem:[%s44 + $0x8] sm:$0xff]
    %v47 = vld [vmem:[%s44 + $0x10] sm:$0xff]
    %v48 = vld [vmem:[%s44 + $0x18] sm:$0xff]
    %v49 = vld [vmem:[%s44 + $0x20] sm:$0xff]
    %v50 = vld [vmem:[%s44 + $0x28] sm:$0xff]
    %v51 = vld [vmem:[%s44 + $0x30] sm:$0xff]
    %v52 = vld [vmem:[%s44 + $0x38] sm:$0xff]
    %v53 = vld [vmem:[%s44 + $0x40] sm:$0xff]
    %v54 = vld [vmem:[%s44 + $0x48] sm:$0xff]
    %v55 = vld [vmem:[%s44 + $0x50] sm:$0xff]
    %v56 = vld [vmem:[%s44 + $0x58] sm:$0xff]
    %v57 = vld [vmem:[%s44 + $0x60] sm:$0xff]
    %v58 = vld [vmem:[%s44 + $0x68] sm:$0xff]
    %v59 = vld [vmem:[%s44 + $0x70] sm:$0xff]
    %v60 = vld [vmem:[%s44 + $0x78] sm:$0xff]
    %62 = vrot.lane.b32.xlu0 %v33, 112
    %v63 = vpop.permute.xlu0 %62
    %vm64 = vcmask 64512
    %v65 = vsel %vm64, %v63, 0
    %67 = vmatprep.subr.mxu0 0.0
    %68 = vmatpush1.msra.mxu0 0.0
    %69 = vmatprep.subr.mxu0 0.0
    %70 = vmatpush1.msra.mxu0 0.0
    %71 = vmatprep.subr.mxu0 0.0
    %72 = vmatpush1.msra.mxu0 0.0
    %73 = vmatprep.subr.mxu0 0.0
    %74 = vmatpush1.msra.mxu0 0.0
    %75 = vmatprep.subr.mxu0 0.0
    %76 = vmatpush1.msra.mxu0 0.0
    %77 = vmatprep.subr.mxu0 0.0
    %78 = vmatpush1.msra.mxu0 0.0
    %79 = vmatprep.subr.mxu0 0.0
    %80 = vmatpush1.msra.mxu0 0.0
    %81 = vmatprep.subr.mxu0 0.0
    %82 = vmatpush1.msra.mxu0 0.0
    %83 = vmatprep.subr.mxu0 0.0
    %84 = vmatpush1.msra.mxu0 0.0
    %85 = vmatprep.subr.mxu0 0.0
    %86 = vmatpush1.msra.mxu0 0.0
    %87 = vmatprep.subr.mxu0 0.0
    %88 = vmatpush1.msra.mxu0 0.0
    %89 = vmatprep.subr.mxu0 0.0
    %90 = vmatpush1.msra.mxu0 0.0
    %91 = vmatprep.subr.mxu0 0.0
    %92 = vmatpush1.msra.mxu0 0.0
    %93 = vmatprep.subr.mxu0 0.0
    %94 = vmatpush1.msra.mxu0 0.0
    %95 = vmatprep.subr.mxu0 0.0
    %96 = vmatpush1.msra.mxu0 0.0
    %97 = vmatprep.subr.mxu0 0.0
    %98 = vmatpush1.msra.mxu0 %v23
    %99 = vmatprep.subr.mxu0 0.0
    %100 = vmatpush2.msra.mxu0 0.0
    %101 = vmatprep.subr.mxu0 0.0
    %102 = vmatpush2.msra.mxu0 0.0
    %103 = vmatprep.subr.mxu0 0.0
    %104 = vmatpush2.msra.mxu0 0.0
    %105 = vmatprep.subr.mxu0 0.0
    %106 = vmatpush2.msra.mxu0 0.0
    %107 = vmatprep.subr.mxu0 0.0
    %108 = vmatpush2.msra.mxu0 0.0
    %109 = vmatprep.subr.mxu0 0.0
    %110 = vmatpush2.msra.mxu0 0.0
    %111 = vmatprep.subr.mxu0 0.0
    %112 = vmatpush2.msra.mxu0 0.0
    %113 = vmatprep.subr.mxu0 0.0
    %114 = vmatpush2.msra.mxu0 0.0
    %115 = vmatprep.subr.mxu0 0.0
    %116 = vmatpush2.msra.mxu0 0.0
    %117 = vmatprep.subr.mxu0 0.0
    %118 = vmatpush2.msra.mxu0 0.0
    %119 = vmatprep.subr.mxu0 0.0
    %120 = vmatpush2.msra.mxu0 0.0
    %121 = vmatprep.subr.mxu0 0.0
    %122 = vmatpush2.msra.mxu0 0.0
    %123 = vmatprep.subr.mxu0 0.0
    %124 = vmatpush2.msra.mxu0 0.0
    %125 = vmatprep.subr.mxu0 0.0
    %126 = vmatpush2.msra.mxu0 0.0
    %127 = vmatprep.subr.mxu0 0.0
    %128 = vmatpush2.msra.mxu0 0.0
    %129 = vmatprep.subr.mxu0 0.0
    %130 = vmatpush2.msra.mxu0 0.0
    %131 = vmatprep.mubr.f32.mxu0 0.0
    %132 = vmatmul.mubr.f32.gmra.mxu0 %v65
    %v133 = vpop.f32.mrf.mxu0
    %v134 = vadd.f32 0.0, %v133
    %v135 = vpop.f32.mrf.mxu0
    %136 = vdwg.mxu0
    %v137 = vadd.f32 %v39, %v134
    %v138 = vmul.f32 %v137, 0.5
    %v139 = vsel %vm26, %v138, %v137
    %v140 = vtanh.pop %v139
    %v141 = vmul.f32 %v140, 0.5
    %v142 = vadd.f32 %v141, 0.5
    %v143 = vsel %vm26, %v142, %v140
    %v144 = vmul.f32 %v143, %v34
    %146 = vrot.lane.b32.xlu0 %v143, 104
    %v147 = vpop.permute.xlu0 %146
    %v149 = vmul.f32 %v143, %v147
    %151 = vrot.lane.b32.xlu0 %v149, 8
    %v152 = vpop.permute.xlu0 %151
    %v154 = vadd.f32 %v144, %v152
    %v155 = vtanh.pop %v154
    %157 = vrot.lane.b32.xlu0 %v155, 8
    %v158 = vpop.permute.xlu0 %157
    %v160 = vmul.f32 %v143, %v158
    %162 = vrot.lane.b32.xlu0 %v160, 112
    %v163 = vpop.permute.xlu0 %162
    %v164 = vsel %vm64, %v163, 0
    %166 = vmatprep.subr.mxu0 0.0
    %167 = vmatpush1.msra.mxu0 0.0
    %168 = vmatprep.subr.mxu0 0.0
    %169 = vmatpush1.msra.mxu0 0.0
    %170 = vmatprep.subr.mxu0 0.0
    %171 = vmatpush1.msra.mxu0 0.0
    %172 = vmatprep.subr.mxu0 0.0
    %173 = vmatpush1.msra.mxu0 0.0
    %174 = vmatprep.subr.mxu0 0.0
    %175 = vmatpush1.msra.mxu0 0.0
    %176 = vmatprep.subr.mxu0 0.0
    %177 = vmatpush1.msra.mxu0 0.0
    %178 = vmatprep.subr.mxu0 0.0
    %179 = vmatpush1.msra.mxu0 0.0
    %180 = vmatprep.subr.mxu0 0.0
    %181 = vmatpush1.msra.mxu0 0.0
    %182 = vmatprep.subr.mxu0 0.0
    %183 = vmatpush1.msra.mxu0 0.0
    %184 = vmatprep.subr.mxu0 0.0
    %185 = vmatpush1.msra.mxu0 0.0
    %186 = vmatprep.subr.mxu0 0.0
    %187 = vmatpush1.msra.mxu0 0.0
    %188 = vmatprep.subr.mxu0 0.0
    %189 = vmatpush1.msra.mxu0 0.0
    %190 = vmatprep.subr.mxu0 0.0
    %191 = vmatpush1.msra.mxu0 0.0
    %192 = vmatprep.subr.mxu0 0.0
    %193 = vmatpush1.msra.mxu0 0.0
    %194 = vmatprep.subr.mxu0 0.0
    %195 = vmatpush1.msra.mxu0 0.0
    %196 = vmatprep.subr.mxu0 0.0
    %197 = vmatpush1.msra.mxu0 %v23
    %198 = vmatprep.subr.mxu0 0.0
    %199 = vmatpush2.msra.mxu0 0.0
    %200 = vmatprep.subr.mxu0 0.0
    %201 = vmatpush2.msra.mxu0 0.0
    %202 = vmatprep.subr.mxu0 0.0
    %203 = vmatpush2.msra.mxu0 0.0
    %204 = vmatprep.subr.mxu0 0.0
    %205 = vmatpush2.msra.mxu0 0.0
    %206 = vmatprep.subr.mxu0 0.0
    %207 = vmatpush2.msra.mxu0 0.0
    %208 = vmatprep.subr.mxu0 0.0
    %209 = vmatpush2.msra.mxu0 0.0
    %210 = vmatprep.subr.mxu0 0.0
    %211 = vmatpush2.msra.mxu0 0.0
    %212 = vmatprep.subr.mxu0 0.0
    %213 = vmatpush2.msra.mxu0 0.0
    %214 = vmatprep.subr.mxu0 0.0
    %215 = vmatpush2.msra.mxu0 0.0
    %216 = vmatprep.subr.mxu0 0.0
    %217 = vmatpush2.msra.mxu0 0.0
    %218 = vmatprep.subr.mxu0 0.0
    %219 = vmatpush2.msra.mxu0 0.0
    %220 = vmatprep.subr.mxu0 0.0
    %221 = vmatpush2.msra.mxu0 0.0
    %222 = vmatprep.subr.mxu0 0.0
    %223 = vmatpush2.msra.mxu0 0.0
    %224 = vmatprep.subr.mxu0 0.0
    %225 = vmatpush2.msra.mxu0 0.0
    %226 = vmatprep.subr.mxu0 0.0
    %227 = vmatpush2.msra.mxu0 0.0
    %228 = vmatprep.subr.mxu0 0.0
    %229 = vmatpush2.msra.mxu0 0.0
    %230 = vmatprep.mubr.f32.mxu0 0.0
    %231 = vmatmul.mubr.f32.gmra.mxu0 %v164
    %v232 = vpop.f32.mrf.mxu0
    %v233 = vadd.f32 0.0, %v232
    %v234 = vpop.f32.mrf.mxu0
    %235 = vdwg.mxu0
    %237 = vrot.lane.b32.xlu0 %v233, 32
    %v238 = vpop.permute.xlu0 %237
    %v240 = vadd.f32 %v39, %v238
    %v241 = vmul.f32 %v240, 0.5
    %243 = vrot.lane.b32.xlu0 %v241, 96
    %v244 = vpop.permute.xlu0 %243
    %247 = vrot.lane.b32.xlu0 %v240, 96
    %v248 = vpop.permute.xlu0 %247
    %v250 = vsel %vm26, %v244, %v248
    %v251 = vtanh.pop %v250
    %v252 = vmul.f32 %v251, 0.5
    %v253 = vadd.f32 %v252, 0.5
    %v254 = vsel %vm26, %v253, %v251
    %v255 = vmul.f32 %v254, %v154
    %257 = vrot.lane.b32.xlu0 %v254, 104
    %v258 = vpop.permute.xlu0 %257
    %v260 = vmul.f32 %v254, %v258
    %262 = vrot.lane.b32.xlu0 %v260, 8
    %v263 = vpop.permute.xlu0 %262
    %v265 = vadd.f32 %v255, %v263
    %v266 = vtanh.pop %v265
    %268 = vrot.lane.b32.xlu0 %v266, 8
    %v269 = vpop.permute.xlu0 %268
    %v271 = vmul.f32 %v254, %v269
    %273 = vrot.lane.b32.xlu0 %v271, 112
    %v274 = vpop.permute.xlu0 %273
    %v275 = vsel %vm64, %v274, 0
    %277 = vmatprep.subr.mxu0 0.0
    %278 = vmatpush1.msra.mxu0 0.0
    %279 = vmatprep.subr.mxu0 0.0
    %280 = vmatpush1.msra.mxu0 0.0
    %281 = vmatprep.subr.mxu0 0.0
    %282 = vmatpush1.msra.mxu0 0.0
    %283 = vmatprep.subr.mxu0 0.0
    %284 = vmatpush1.msra.mxu0 0.0
    %285 = vmatprep.subr.mxu0 0.0
    %286 = vmatpush1.msra.mxu0 0.0
    %287 = vmatprep.subr.mxu0 0.0
    %288 = vmatpush1.msra.mxu0 0.0
    %289 = vmatprep.subr.mxu0 0.0
    %290 = vmatpush1.msra.mxu0 0.0
    %291 = vmatprep.subr.mxu0 0.0
    %292 = vmatpush1.msra.mxu0 0.0
    %293 = vmatprep.subr.mxu0 0.0
    %294 = vmatpush1.msra.mxu0 0.0
    %295 = vmatprep.subr.mxu0 0.0
    %296 = vmatpush1.msra.mxu0 0.0
    %297 = vmatprep.subr.mxu0 0.0
    %298 = vmatpush1.msra.mxu0 0.0
    %299 = vmatprep.subr.mxu0 0.0
    %300 = vmatpush1.msra.mxu0 0.0
    %301 = vmatprep.subr.mxu0 0.0
    %302 = vmatpush1.msra.mxu0 0.0
    %303 = vmatprep.subr.mxu0 0.0
    %304 = vmatpush1.msra.mxu0 0.0
    %305 = vmatprep.subr.mxu0 0.0
    %306 = vmatpush1.msra.mxu0 0.0
    %307 = vmatprep.subr.mxu0 0.0
    %308 = vmatpush1.msra.mxu0 %v23
    %309 = vmatprep.subr.mxu0 0.0
    %310 = vmatpush2.msra.mxu0 0.0
    %311 = vmatprep.subr.mxu0 0.0
    %312 = vmatpush2.msra.mxu0 0.0
    %313 = vmatprep.subr.mxu0 0.0
    %314 = vmatpush2.msra.mxu0 0.0
    %315 = vmatprep.subr.mxu0 0.0
    %316 = vmatpush2.msra.mxu0 0.0
    %317 = vmatprep.subr.mxu0 0.0
    %318 = vmatpush2.msra.mxu0 0.0
    %319 = vmatprep.subr.mxu0 0.0
    %320 = vmatpush2.msra.mxu0 0.0
    %321 = vmatprep.subr.mxu0 0.0
    %322 = vmatpush2.msra.mxu0 0.0
    %323 = vmatprep.subr.mxu0 0.0
    %324 = vmatpush2.msra.mxu0 0.0
    %325 = vmatprep.subr.mxu0 0.0
    %326 = vmatpush2.msra.mxu0 0.0
    %327 = vmatprep.subr.mxu0 0.0
    %328 = vmatpush2.msra.mxu0 0.0
    %329 = vmatprep.subr.mxu0 0.0
    %330 = vmatpush2.msra.mxu0 0.0
    %331 = vmatprep.subr.mxu0 0.0
    %332 = vmatpush2.msra.mxu0 0.0
    %333 = vmatprep.subr.mxu0 0.0
    %334 = vmatpush2.msra.mxu0 0.0
    %335 = vmatprep.subr.mxu0 0.0
    %336 = vmatpush2.msra.mxu0 0.0
    %337 = vmatprep.subr.mxu0 0.0
    %338 = vmatpush2.msra.mxu0 0.0
    %339 = vmatprep.subr.mxu0 0.0
    %340 = vmatpush2.msra.mxu0 0.0
    %341 = vmatprep.mubr.f32.mxu0 0.0
    %342 = vmatmul.mubr.f32.gmra.mxu0 %v275
    %v343 = vpop.f32.mrf.mxu0
    %v344 = vadd.f32 0.0, %v343
    %v345 = vpop.f32.mrf.mxu0
    %346 = vdwg.mxu0
    %348 = vrot.lane.b32.xlu0 %v344, 64
    %v349 = vpop.permute.xlu0 %348
    %v351 = vadd.f32 %v39, %v349
    %v352 = vmul.f32 %v351, 0.5
    %354 = vrot.lane.b32.xlu0 %v352, 64
    %v355 = vpop.permute.xlu0 %354
    %358 = vrot.lane.b32.xlu0 %v351, 64
    %v359 = vpop.permute.xlu0 %358
    %v361 = vsel %vm26, %v355, %v359
    %v362 = vtanh.pop %v361
    %v363 = vmul.f32 %v362, 0.5
    %v364 = vadd.f32 %v363, 0.5
    %v365 = vsel %vm26, %v364, %v362
    %v366 = vmul.f32 %v365, %v265
    %368 = vrot.lane.b32.xlu0 %v365, 104
    %v369 = vpop.permute.xlu0 %368
    %v371 = vmul.f32 %v365, %v369
    %373 = vrot.lane.b32.xlu0 %v371, 8
    %v374 = vpop.permute.xlu0 %373
    %v376 = vadd.f32 %v366, %v374
    %v377 = vtanh.pop %v376
    %379 = vrot.lane.b32.xlu0 %v377, 8
    %v380 = vpop.permute.xlu0 %379
    %v382 = vmul.f32 %v365, %v380
    %384 = vrot.lane.b32.xlu0 %v382, 112
    %v385 = vpop.permute.xlu0 %384
    %v386 = vsel %vm64, %v385, 0
    %388 = vmatprep.subr.mxu0 0.0
    %389 = vmatpush1.msra.mxu0 0.0
    %390 = vmatprep.subr.mxu0 0.0
    %391 = vmatpush1.msra.mxu0 0.0
    %392 = vmatprep.subr.mxu0 0.0
    %393 = vmatpush1.msra.mxu0 0.0
    %394 = vmatprep.subr.mxu0 0.0
    %395 = vmatpush1.msra.mxu0 0.0
    %396 = vmatprep.subr.mxu0 0.0
    %397 = vmatpush1.msra.mxu0 0.0
    %398 = vmatprep.subr.mxu0 0.0
    %399 = vmatpush1.msra.mxu0 0.0
    %400 = vmatprep.subr.mxu0 0.0
    %401 = vmatpush1.msra.mxu0 0.0
    %402 = vmatprep.subr.mxu0 0.0
    %403 = vmatpush1.msra.mxu0 0.0
    %404 = vmatprep.subr.mxu0 0.0
    %405 = vmatpush1.msra.mxu0 0.0
    %406 = vmatprep.subr.mxu0 0.0
    %407 = vmatpush1.msra.mxu0 0.0
    %408 = vmatprep.subr.mxu0 0.0
    %409 = vmatpush1.msra.mxu0 0.0
    %410 = vmatprep.subr.mxu0 0.0
    %411 = vmatpush1.msra.mxu0 0.0
    %412 = vmatprep.subr.mxu0 0.0
    %413 = vmatpush1.msra.mxu0 0.0
    %414 = vmatprep.subr.mxu0 0.0
    %415 = vmatpush1.msra.mxu0 0.0
    %416 = vmatprep.subr.mxu0 0.0
    %417 = vmatpush1.msra.mxu0 0.0
    %418 = vmatprep.subr.mxu0 0.0
    %419 = vmatpush1.msra.mxu0 %v23
    %420 = vmatprep.subr.mxu0 0.0
    %421 = vmatpush2.msra.mxu0 0.0
    %422 = vmatprep.subr.mxu0 0.0
    %423 = vmatpush2.msra.mxu0 0.0
    %424 = vmatprep.subr.mxu0 0.0
    %425 = vmatpush2.msra.mxu0 0.0
    %426 = vmatprep.subr.mxu0 0.0
    %427 = vmatpush2.msra.mxu0 0.0
    %428 = vmatprep.subr.mxu0 0.0
    %429 = vmatpush2.msra.mxu0 0.0
    %430 = vmatprep.subr.mxu0 0.0
    %431 = vmatpush2.msra.mxu0 0.0
    %432 = vmatprep.subr.mxu0 0.0
    %433 = vmatpush2.msra.mxu0 0.0
    %434 = vmatprep.subr.mxu0 0.0
    %435 = vmatpush2.msra.mxu0 0.0
    %436 = vmatprep.subr.mxu0 0.0
    %437 = vmatpush2.msra.mxu0 0.0
    %438 = vmatprep.subr.mxu0 0.0
    %439 = vmatpush2.msra.mxu0 0.0
    %440 = vmatprep.subr.mxu0 0.0
    %441 = vmatpush2.msra.mxu0 0.0
    %442 = vmatprep.subr.mxu0 0.0
    %443 = vmatpush2.msra.mxu0 0.0
    %444 = vmatprep.subr.mxu0 0.0
    %445 = vmatpush2.msra.mxu0 0.0
    %446 = vmatprep.subr.mxu0 0.0
    %447 = vmatpush2.msra.mxu0 0.0
    %448 = vmatprep.subr.mxu0 0.0
    %449 = vmatpush2.msra.mxu0 0.0
    %450 = vmatprep.subr.mxu0 0.0
    %451 = vmatpush2.msra.mxu0 0.0
    %452 = vmatprep.mubr.f32.mxu0 0.0
    %453 = vmatmul.mubr.f32.gmra.mxu0 %v386
    %v454 = vpop.f32.mrf.mxu0
    %v455 = vadd.f32 0.0, %v454
    %v456 = vpop.f32.mrf.mxu0
    %457 = vdwg.mxu0
    %459 = vrot.lane.b32.xlu0 %v455, 96
    %v460 = vpop.permute.xlu0 %459
    %v462 = vadd.f32 %v39, %v460
    %v463 = vmul.f32 %v462, 0.5
    %465 = vrot.lane.b32.xlu0 %v463, 32
    %v466 = vpop.permute.xlu0 %465
    %469 = vrot.lane.b32.xlu0 %v462, 32
    %v470 = vpop.permute.xlu0 %469
    %v472 = vsel %vm26, %v466, %v470
    %v473 = vtanh.pop %v472
    %v474 = vmul.f32 %v473, 0.5
    %v475 = vadd.f32 %v474, 0.5
    %v476 = vsel %vm26, %v475, %v473
    %v477 = vmul.f32 %v476, %v376
    %479 = vrot.lane.b32.xlu0 %v476, 104
    %v480 = vpop.permute.xlu0 %479
    %v482 = vmul.f32 %v476, %v480
    %484 = vrot.lane.b32.xlu0 %v482, 8
    %v485 = vpop.permute.xlu0 %484
    %v487 = vadd.f32 %v477, %v485
    %v488 = vtanh.pop %v487
    %490 = vrot.lane.b32.xlu0 %v488, 8
    %v491 = vpop.permute.xlu0 %490
    %v493 = vmul.f32 %v476, %v491
    %495 = vrot.lane.b32.xlu0 %v493, 112
    %v496 = vpop.permute.xlu0 %495
    %v497 = vsel %vm64, %v496, 0
    %499 = vmatprep.subr.mxu0 0.0
    %500 = vmatpush1.msra.mxu0 0.0
    %501 = vmatprep.subr.mxu0 0.0
    %502 = vmatpush1.msra.mxu0 0.0
    %503 = vmatprep.subr.mxu0 0.0
    %504 = vmatpush1.msra.mxu0 0.0
    %505 = vmatprep.subr.mxu0 0.0
    %506 = vmatpush1.msra.mxu0 0.0
    %507 = vmatprep.subr.mxu0 0.0
    %508 = vmatpush1.msra.mxu0 0.0
    %509 = vmatprep.subr.mxu0 0.0
    %510 = vmatpush1.msra.mxu0 0.0
    %511 = vmatprep.subr.mxu0 0.0
    %512 = vmatpush1.msra.mxu0 0.0
    %513 = vmatprep.subr.mxu0 0.0
    %514 = vmatpush1.msra.mxu0 0.0
    %515 = vmatprep.subr.mxu0 0.0
    %516 = vmatpush1.msra.mxu0 0.0
    %517 = vmatprep.subr.mxu0 0.0
    %518 = vmatpush1.msra.mxu0 0.0
    %519 = vmatprep.subr.mxu0 0.0
    %520 = vmatpush1.msra.mxu0 0.0
    %521 = vmatprep.subr.mxu0 0.0
    %522 = vmatpush1.msra.mxu0 0.0
    %523 = vmatprep.subr.mxu0 0.0
    %524 = vmatpush1.msra.mxu0 0.0
    %525 = vmatprep.subr.mxu0 0.0
    %526 = vmatpush1.msra.mxu0 0.0
    %527 = vmatprep.subr.mxu0 0.0
    %528 = vmatpush1.msra.mxu0 0.0
    %529 = vmatprep.subr.mxu0 0.0
    %530 = vmatpush1.msra.mxu0 %v23
    %531 = vmatprep.subr.mxu0 0.0
    %532 = vmatpush2.msra.mxu0 0.0
    %533 = vmatprep.subr.mxu0 0.0
    %534 = vmatpush2.msra.mxu0 0.0
    %535 = vmatprep.subr.mxu0 0.0
    %536 = vmatpush2.msra.mxu0 0.0
    %537 = vmatprep.subr.mxu0 0.0
    %538 = vmatpush2.msra.mxu0 0.0
    %539 = vmatprep.subr.mxu0 0.0
    %540 = vmatpush2.msra.mxu0 0.0
    %541 = vmatprep.subr.mxu0 0.0
    %542 = vmatpush2.msra.mxu0 0.0
    %543 = vmatprep.subr.mxu0 0.0
    %544 = vmatpush2.msra.mxu0 0.0
    %545 = vmatprep.subr.mxu0 0.0
    %546 = vmatpush2.msra.mxu0 0.0
    %547 = vmatprep.subr.mxu0 0.0
    %548 = vmatpush2.msra.mxu0 0.0
    %549 = vmatprep.subr.mxu0 0.0
    %550 = vmatpush2.msra.mxu0 0.0
    %551 = vmatprep.subr.mxu0 0.0
    %552 = vmatpush2.msra.mxu0 0.0
    %553 = vmatprep.subr.mxu0 0.0
    %554 = vmatpush2.msra.mxu0 0.0
    %555 = vmatprep.subr.mxu0 0.0
    %556 = vmatpush2.msra.mxu0 0.0
    %557 = vmatprep.subr.mxu0 0.0
    %558 = vmatpush2.msra.mxu0 0.0
    %559 = vmatprep.subr.mxu0 0.0
    %560 = vmatpush2.msra.mxu0 0.0
    %561 = vmatprep.subr.mxu0 0.0
    %562 = vmatpush2.msra.mxu0 0.0
    %563 = vmatprep.mubr.f32.mxu0 0.0
    %564 = vmatmul.mubr.f32.gmra.mxu0 %v497
    %v565 = vpop.f32.mrf.mxu0
    %v566 = vadd.f32 0.0, %v565
    %v567 = vpop.f32.mrf.mxu0
    %568 = vdwg.mxu0
    %v569 = vadd.f32 %v40, %v566
    %v570 = vmul.f32 %v569, 0.5
    %v571 = vsel %vm26, %v570, %v569
    %v572 = vtanh.pop %v571
    %v573 = vmul.f32 %v572, 0.5
    %v574 = vadd.f32 %v573, 0.5
    %v575 = vsel %vm26, %v574, %v572
    %v576 = vmul.f32 %v575, %v487
    %578 = vrot.lane.b32.xlu0 %v575, 104
    %v579 = vpop.permute.xlu0 %578
    %v581 = vmul.f32 %v575, %v579
    %583 = vrot.lane.b32.xlu0 %v581, 8
    %v584 = vpop.permute.xlu0 %583
    %v586 = vadd.f32 %v576, %v584
    %v587 = vtanh.pop %v586
    %589 = vrot.lane.b32.xlu0 %v587, 8
    %v590 = vpop.permute.xlu0 %589
    %v592 = vmul.f32 %v575, %v590
    %594 = vrot.lane.b32.xlu0 %v592, 112
    %v595 = vpop.permute.xlu0 %594
    %v596 = vsel %vm64, %v595, 0
    %598 = vmatprep.subr.mxu0 0.0
    %599 = vmatpush1.msra.mxu0 0.0
    %600 = vmatprep.subr.mxu0 0.0
    %601 = vmatpush1.msra.mxu0 0.0
    %602 = vmatprep.subr.mxu0 0.0
    %603 = vmatpush1.msra.mxu0 0.0
    %604 = vmatprep.subr.mxu0 0.0
    %605 = vmatpush1.msra.mxu0 0.0
    %606 = vmatprep.subr.mxu0 0.0
    %607 = vmatpush1.msra.mxu0 0.0
    %608 = vmatprep.subr.mxu0 0.0
    %609 = vmatpush1.msra.mxu0 0.0
    %610 = vmatprep.subr.mxu0 0.0
    %611 = vmatpush1.msra.mxu0 0.0
    %612 = vmatprep.subr.mxu0 0.0
    %613 = vmatpush1.msra.mxu0 0.0
    %614 = vmatprep.subr.mxu0 0.0
    %615 = vmatpush1.msra.mxu0 0.0
    %616 = vmatprep.subr.mxu0 0.0
    %617 = vmatpush1.msra.mxu0 0.0
    %618 = vmatprep.subr.mxu0 0.0
    %619 = vmatpush1.msra.mxu0 0.0
    %620 = vmatprep.subr.mxu0 0.0
    %621 = vmatpush1.msra.mxu0 0.0
    %622 = vmatprep.subr.mxu0 0.0
    %623 = vmatpush1.msra.mxu0 0.0
    %624 = vmatprep.subr.mxu0 0.0
    %625 = vmatpush1.msra.mxu0 0.0
    %626 = vmatprep.subr.mxu0 0.0
    %627 = vmatpush1.msra.mxu0 0.0
    %628 = vmatprep.subr.mxu0 0.0
    %629 = vmatpush1.msra.mxu0 %v23
    %630 = vmatprep.subr.mxu0 0.0
    %631 = vmatpush2.msra.mxu0 0.0
    %632 = vmatprep.subr.mxu0 0.0
    %633 = vmatpush2.msra.mxu0 0.0
    %634 = vmatprep.subr.mxu0 0.0
    %635 = vmatpush2.msra.mxu0 0.0
    %636 = vmatprep.subr.mxu0 0.0
    %637 = vmatpush2.msra.mxu0 0.0
    %638 = vmatprep.subr.mxu0 0.0
    %639 = vmatpush2.msra.mxu0 0.0
    %640 = vmatprep.subr.mxu0 0.0
    %641 = vmatpush2.msra.mxu0 0.0
    %642 = vmatprep.subr.mxu0 0.0
    %643 = vmatpush2.msra.mxu0 0.0
    %644 = vmatprep.subr.mxu0 0.0
    %645 = vmatpush2.msra.mxu0 0.0
    %646 = vmatprep.subr.mxu0 0.0
    %647 = vmatpush2.msra.mxu0 0.0
    %648 = vmatprep.subr.mxu0 0.0
    %649 = vmatpush2.msra.mxu0 0.0
    %650 = vmatprep.subr.mxu0 0.0
    %651 = vmatpush2.msra.mxu0 0.0
    %652 = vmatprep.subr.mxu0 0.0
    %653 = vmatpush2.msra.mxu0 0.0
    %654 = vmatprep.subr.mxu0 0.0
    %655 = vmatpush2.msra.mxu0 0.0
    %656 = vmatprep.subr.mxu0 0.0
    %657 = vmatpush2.msra.mxu0 0.0
    %658 = vmatprep.subr.mxu0 0.0
    %659 = vmatpush2.msra.mxu0 0.0
    %660 = vmatprep.subr.mxu0 0.0
    %661 = vmatpush2.msra.mxu0 0.0
    %662 = vmatprep.mubr.f32.mxu0 0.0
    %663 = vmatmul.mubr.f32.gmra.mxu0 %v596
    %v664 = vpop.f32.mrf.mxu0
    %v665 = vadd.f32 0.0, %v664
    %v666 = vpop.f32.mrf.mxu0
    %667 = vdwg.mxu0
    %669 = vrot.lane.b32.xlu0 %v665, 32
    %v670 = vpop.permute.xlu0 %669
    %v672 = vadd.f32 %v40, %v670
    %v673 = vmul.f32 %v672, 0.5
    %675 = vrot.lane.b32.xlu0 %v673, 96
    %v676 = vpop.permute.xlu0 %675
    %679 = vrot.lane.b32.xlu0 %v672, 96
    %v680 = vpop.permute.xlu0 %679
    %v682 = vsel %vm26, %v676, %v680
    %v683 = vtanh.pop %v682
    %v684 = vmul.f32 %v683, 0.5
    %v685 = vadd.f32 %v684, 0.5
    %v686 = vsel %vm26, %v685, %v683
    %v687 = vmul.f32 %v686, %v586
    %689 = vrot.lane.b32.xlu0 %v686, 104
    %v690 = vpop.permute.xlu0 %689
    %v692 = vmul.f32 %v686, %v690
    %694 = vrot.lane.b32.xlu0 %v692, 8
    %v695 = vpop.permute.xlu0 %694
    %v697 = vadd.f32 %v687, %v695
    %v698 = vtanh.pop %v697
    %700 = vrot.lane.b32.xlu0 %v698, 8
    %v701 = vpop.permute.xlu0 %700
    %v703 = vmul.f32 %v686, %v701
    %705 = vrot.lane.b32.xlu0 %v703, 112
    %v706 = vpop.permute.xlu0 %705
    %v707 = vsel %vm64, %v706, 0
    %709 = vmatprep.subr.mxu0 0.0
    %710 = vmatpush1.msra.mxu0 0.0
    %711 = vmatprep.subr.mxu0 0.0
    %712 = vmatpush1.msra.mxu0 0.0
    %713 = vmatprep.subr.mxu0 0.0
    %714 = vmatpush1.msra.mxu0 0.0
    %715 = vmatprep.subr.mxu0 0.0
    %716 = vmatpush1.msra.mxu0 0.0
    %717 = vmatprep.subr.mxu0 0.0
    %718 = vmatpush1.msra.mxu0 0.0
    %719 = vmatprep.subr.mxu0 0.0
    %720 = vmatpush1.msra.mxu0 0.0
    %721 = vmatprep.subr.mxu0 0.0
    %722 = vmatpush1.msra.mxu0 0.0
    %723 = vmatprep.subr.mxu0 0.0
    %724 = vmatpush1.msra.mxu0 0.0
    %725 = vmatprep.subr.mxu0 0.0
    %726 = vmatpush1.msra.mxu0 0.0
    %727 = vmatprep.subr.mxu0 0.0
    %728 = vmatpush1.msra.mxu0 0.0
    %729 = vmatprep.subr.mxu0 0.0
    %730 = vmatpush1.msra.mxu0 0.0
    %731 = vmatprep.subr.mxu0 0.0
    %732 = vmatpush1.msra.mxu0 0.0
    %733 = vmatprep.subr.mxu0 0.0
    %734 = vmatpush1.msra.mxu0 0.0
    %735 = vmatprep.subr.mxu0 0.0
    %736 = vmatpush1.msra.mxu0 0.0
    %737 = vmatprep.subr.mxu0 0.0
    %738 = vmatpush1.msra.mxu0 0.0
    %739 = vmatprep.subr.mxu0 0.0
    %740 = vmatpush1.msra.mxu0 %v23
    %741 = vmatprep.subr.mxu0 0.0
    %742 = vmatpush2.msra.mxu0 0.0
    %743 = vmatprep.subr.mxu0 0.0
    %744 = vmatpush2.msra.mxu0 0.0
    %745 = vmatprep.subr.mxu0 0.0
    %746 = vmatpush2.msra.mxu0 0.0
    %747 = vmatprep.subr.mxu0 0.0
    %748 = vmatpush2.msra.mxu0 0.0
    %749 = vmatprep.subr.mxu0 0.0
    %750 = vmatpush2.msra.mxu0 0.0
    %751 = vmatprep.subr.mxu0 0.0
    %752 = vmatpush2.msra.mxu0 0.0
    %753 = vmatprep.subr.mxu0 0.0
    %754 = vmatpush2.msra.mxu0 0.0
    %755 = vmatprep.subr.mxu0 0.0
    %756 = vmatpush2.msra.mxu0 0.0
    %757 = vmatprep.subr.mxu0 0.0
    %758 = vmatpush2.msra.mxu0 0.0
    %759 = vmatprep.subr.mxu0 0.0
    %760 = vmatpush2.msra.mxu0 0.0
    %761 = vmatprep.subr.mxu0 0.0
    %762 = vmatpush2.msra.mxu0 0.0
    %763 = vmatprep.subr.mxu0 0.0
    %764 = vmatpush2.msra.mxu0 0.0
    %765 = vmatprep.subr.mxu0 0.0
    %766 = vmatpush2.msra.mxu0 0.0
    %767 = vmatprep.subr.mxu0 0.0
    %768 = vmatpush2.msra.mxu0 0.0
    %769 = vmatprep.subr.mxu0 0.0
    %770 = vmatpush2.msra.mxu0 0.0
    %771 = vmatprep.subr.mxu0 0.0
    %772 = vmatpush2.msra.mxu0 0.0
    %773 = vmatprep.mubr.f32.mxu0 0.0
    %774 = vmatmul.mubr.f32.gmra.mxu0 %v707
    %v775 = vpop.f32.mrf.mxu0
    %v776 = vadd.f32 0.0, %v775
    %v777 = vpop.f32.mrf.mxu0
    %778 = vdwg.mxu0
    %780 = vrot.lane.b32.xlu0 %v776, 64
    %v781 = vpop.permute.xlu0 %780
    %v783 = vadd.f32 %v40, %v781
    %v784 = vmul.f32 %v783, 0.5
    %786 = vrot.lane.b32.xlu0 %v784, 64
    %v787 = vpop.permute.xlu0 %786
    %790 = vrot.lane.b32.xlu0 %v783, 64
    %v791 = vpop.permute.xlu0 %790
    %v793 = vsel %vm26, %v787, %v791
    %v794 = vtanh.pop %v793
    %v795 = vmul.f32 %v794, 0.5
    %v796 = vadd.f32 %v795, 0.5
    %v797 = vsel %vm26, %v796, %v794
    %v798 = vmul.f32 %v797, %v697
    %800 = vrot.lane.b32.xlu0 %v797, 104
    %v801 = vpop.permute.xlu0 %800
    %v803 = vmul.f32 %v797, %v801
    %805 = vrot.lane.b32.xlu0 %v803, 8
    %v806 = vpop.permute.xlu0 %805
    %v808 = vadd.f32 %v798, %v806
    %v809 = vtanh.pop %v808
    %811 = vrot.lane.b32.xlu0 %v809, 8
    %v812 = vpop.permute.xlu0 %811
    %v814 = vmul.f32 %v797, %v812
    %816 = vrot.lane.b32.xlu0 %v814, 112
    %v817 = vpop.permute.xlu0 %816
    %v818 = vsel %vm64, %v817, 0
    %820 = vmatprep.subr.mxu0 0.0
    %821 = vmatpush1.msra.mxu0 0.0
    %822 = vmatprep.subr.mxu0 0.0
    %823 = vmatpush1.msra.mxu0 0.0
    %824 = vmatprep.subr.mxu0 0.0
    %825 = vmatpush1.msra.mxu0 0.0
    %826 = vmatprep.subr.mxu0 0.0
    %827 = vmatpush1.msra.mxu0 0.0
    %828 = vmatprep.subr.mxu0 0.0
    %829 = vmatpush1.msra.mxu0 0.0
    %830 = vmatprep.subr.mxu0 0.0
    %831 = vmatpush1.msra.mxu0 0.0
    %832 = vmatprep.subr.mxu0 0.0
    %833 = vmatpush1.msra.mxu0 0.0
    %834 = vmatprep.subr.mxu0 0.0
    %835 = vmatpush1.msra.mxu0 0.0
    %836 = vmatprep.subr.mxu0 0.0
    %837 = vmatpush1.msra.mxu0 0.0
    %838 = vmatprep.subr.mxu0 0.0
    %839 = vmatpush1.msra.mxu0 0.0
    %840 = vmatprep.subr.mxu0 0.0
    %841 = vmatpush1.msra.mxu0 0.0
    %842 = vmatprep.subr.mxu0 0.0
    %843 = vmatpush1.msra.mxu0 0.0
    %844 = vmatprep.subr.mxu0 0.0
    %845 = vmatpush1.msra.mxu0 0.0
    %846 = vmatprep.subr.mxu0 0.0
    %847 = vmatpush1.msra.mxu0 0.0
    %848 = vmatprep.subr.mxu0 0.0
    %849 = vmatpush1.msra.mxu0 0.0
    %850 = vmatprep.subr.mxu0 0.0
    %851 = vmatpush1.msra.mxu0 %v23
    %852 = vmatprep.subr.mxu0 0.0
    %853 = vmatpush2.msra.mxu0 0.0
    %854 = vmatprep.subr.mxu0 0.0
    %855 = vmatpush2.msra.mxu0 0.0
    %856 = vmatprep.subr.mxu0 0.0
    %857 = vmatpush2.msra.mxu0 0.0
    %858 = vmatprep.subr.mxu0 0.0
    %859 = vmatpush2.msra.mxu0 0.0
    %860 = vmatprep.subr.mxu0 0.0
    %861 = vmatpush2.msra.mxu0 0.0
    %862 = vmatprep.subr.mxu0 0.0
    %863 = vmatpush2.msra.mxu0 0.0
    %864 = vmatprep.subr.mxu0 0.0
    %865 = vmatpush2.msra.mxu0 0.0
    %866 = vmatprep.subr.mxu0 0.0
    %867 = vmatpush2.msra.mxu0 0.0
    %868 = vmatprep.subr.mxu0 0.0
    %869 = vmatpush2.msra.mxu0 0.0
    %870 = vmatprep.subr.mxu0 0.0
    %871 = vmatpush2.msra.mxu0 0.0
    %872 = vmatprep.subr.mxu0 0.0
    %873 = vmatpush2.msra.mxu0 0.0
    %874 = vmatprep.subr.mxu0 0.0
    %875 = vmatpush2.msra.mxu0 0.0
    %876 = vmatprep.subr.mxu0 0.0
    %877 = vmatpush2.msra.mxu0 0.0
    %878 = vmatprep.subr.mxu0 0.0
    %879 = vmatpush2.msra.mxu0 0.0
    %880 = vmatprep.subr.mxu0 0.0
    %881 = vmatpush2.msra.mxu0 0.0
    %882 = vmatprep.subr.mxu0 0.0
    %883 = vmatpush2.msra.mxu0 0.0
    %884 = vmatprep.mubr.f32.mxu0 0.0
    %885 = vmatmul.mubr.f32.gmra.mxu0 %v818
    %v886 = vpop.f32.mrf.mxu0
    %v887 = vadd.f32 0.0, %v886
    %v888 = vpop.f32.mrf.mxu0
    %889 = vdwg.mxu0
    %891 = vrot.lane.b32.xlu0 %v887, 96
    %v892 = vpop.permute.xlu0 %891
    %v894 = vadd.f32 %v40, %v892
    %v895 = vmul.f32 %v894, 0.5
    %897 = vrot.lane.b32.xlu0 %v895, 32
    %v898 = vpop.permute.xlu0 %897
    %901 = vrot.lane.b32.xlu0 %v894, 32
    %v902 = vpop.permute.xlu0 %901
    %v904 = vsel %vm26, %v898, %v902
    %v905 = vtanh.pop %v904
    %v906 = vmul.f32 %v905, 0.5
    %v907 = vadd.f32 %v906, 0.5
    %v908 = vsel %vm26, %v907, %v905
    %v909 = vmul.f32 %v908, %v808
    %911 = vrot.lane.b32.xlu0 %v908, 104
    %v912 = vpop.permute.xlu0 %911
    %v914 = vmul.f32 %v908, %v912
    %916 = vrot.lane.b32.xlu0 %v914, 8
    %v917 = vpop.permute.xlu0 %916
    %v919 = vadd.f32 %v909, %v917
    %v920 = vtanh.pop %v919
    %922 = vrot.lane.b32.xlu0 %v920, 8
    %v923 = vpop.permute.xlu0 %922
    %v925 = vmul.f32 %v908, %v923
    %927 = vrot.lane.b32.xlu0 %v925, 112
    %v928 = vpop.permute.xlu0 %927
    %v929 = vsel %vm64, %v928, 0
    %931 = vmatprep.subr.mxu0 0.0
    %932 = vmatpush1.msra.mxu0 0.0
    %933 = vmatprep.subr.mxu0 0.0
    %934 = vmatpush1.msra.mxu0 0.0
    %935 = vmatprep.subr.mxu0 0.0
    %936 = vmatpush1.msra.mxu0 0.0
    %937 = vmatprep.subr.mxu0 0.0
    %938 = vmatpush1.msra.mxu0 0.0
    %939 = vmatprep.subr.mxu0 0.0
    %940 = vmatpush1.msra.mxu0 0.0
    %941 = vmatprep.subr.mxu0 0.0
    %942 = vmatpush1.msra.mxu0 0.0
    %943 = vmatprep.subr.mxu0 0.0
    %944 = vmatpush1.msra.mxu0 0.0
    %945 = vmatprep.subr.mxu0 0.0
    %946 = vmatpush1.msra.mxu0 0.0
    %947 = vmatprep.subr.mxu0 0.0
    %948 = vmatpush1.msra.mxu0 0.0
    %949 = vmatprep.subr.mxu0 0.0
    %950 = vmatpush1.msra.mxu0 0.0
    %951 = vmatprep.subr.mxu0 0.0
    %952 = vmatpush1.msra.mxu0 0.0
    %953 = vmatprep.subr.mxu0 0.0
    %954 = vmatpush1.msra.mxu0 0.0
    %955 = vmatprep.subr.mxu0 0.0
    %956 = vmatpush1.msra.mxu0 0.0
    %957 = vmatprep.subr.mxu0 0.0
    %958 = vmatpush1.msra.mxu0 0.0
    %959 = vmatprep.subr.mxu0 0.0
    %960 = vmatpush1.msra.mxu0 0.0
    %961 = vmatprep.subr.mxu0 0.0
    %962 = vmatpush1.msra.mxu0 %v23
    %963 = vmatprep.subr.mxu0 0.0
    %964 = vmatpush2.msra.mxu0 0.0
    %965 = vmatprep.subr.mxu0 0.0
    %966 = vmatpush2.msra.mxu0 0.0
    %967 = vmatprep.subr.mxu0 0.0
    %968 = vmatpush2.msra.mxu0 0.0
    %969 = vmatprep.subr.mxu0 0.0
    %970 = vmatpush2.msra.mxu0 0.0
    %971 = vmatprep.subr.mxu0 0.0
    %972 = vmatpush2.msra.mxu0 0.0
    %973 = vmatprep.subr.mxu0 0.0
    %974 = vmatpush2.msra.mxu0 0.0
    %975 = vmatprep.subr.mxu0 0.0
    %976 = vmatpush2.msra.mxu0 0.0
    %977 = vmatprep.subr.mxu0 0.0
    %978 = vmatpush2.msra.mxu0 0.0
    %979 = vmatprep.subr.mxu0 0.0
    %980 = vmatpush2.msra.mxu0 0.0
    %981 = vmatprep.subr.mxu0 0.0
    %982 = vmatpush2.msra.mxu0 0.0
    %983 = vmatprep.subr.mxu0 0.0
    %984 = vmatpush2.msra.mxu0 0.0
    %985 = vmatprep.subr.mxu0 0.0
    %986 = vmatpush2.msra.mxu0 0.0
    %987 = vmatprep.subr.mxu0 0.0
    %988 = vmatpush2.msra.mxu0 0.0
    %989 = vmatprep.subr.mxu0 0.0
    %990 = vmatpush2.msra.mxu0 0.0
    %991 = vmatprep.subr.mxu0 0.0
    %992 = vmatpush2.msra.mxu0 0.0
    %993 = vmatprep.subr.mxu0 0.0
    %994 = vmatpush2.msra.mxu0 0.0
    %995 = vmatprep.mubr.f32.mxu0 0.0
    %996 = vmatmul.mubr.f32.gmra.mxu0 %v929
    %v997 = vpop.f32.mrf.mxu0
    %v998 = vadd.f32 0.0, %v997
    %v999 = vpop.f32.mrf.mxu0
    %1000 = vdwg.mxu0
    %v1001 = vadd.f32 %v41, %v998
    %v1002 = vmul.f32 %v1001, 0.5
    %v1003 = vsel %vm26, %v1002, %v1001
    %v1004 = vtanh.pop %v1003
    %v1005 = vmul.f32 %v1004, 0.5
    %v1006 = vadd.f32 %v1005, 0.5
    %v1007 = vsel %vm26, %v1006, %v1004
    %v1008 = vmul.f32 %v1007, %v919
    %1010 = vrot.lane.b32.xlu0 %v1007, 104
    %v1011 = vpop.permute.xlu0 %1010
    %v1013 = vmul.f32 %v1007, %v1011
    %1015 = vrot.lane.b32.xlu0 %v1013, 8
    %v1016 = vpop.permute.xlu0 %1015
    %v1018 = vadd.f32 %v1008, %v1016
    %v1019 = vtanh.pop %v1018
    %1021 = vrot.lane.b32.xlu0 %v1019, 8
    %v1022 = vpop.permute.xlu0 %1021
    %v1024 = vmul.f32 %v1007, %v1022
    %1026 = vrot.lane.b32.xlu0 %v1024, 112
    %v1027 = vpop.permute.xlu0 %1026
    %v1028 = vsel %vm64, %v1027, 0
    %1030 = vmatprep.subr.mxu0 0.0
    %1031 = vmatpush1.msra.mxu0 0.0
    %1032 = vmatprep.subr.mxu0 0.0
    %1033 = vmatpush1.msra.mxu0 0.0
    %1034 = vmatprep.subr.mxu0 0.0
    %1035 = vmatpush1.msra.mxu0 0.0
    %1036 = vmatprep.subr.mxu0 0.0
    %1037 = vmatpush1.msra.mxu0 0.0
    %1038 = vmatprep.subr.mxu0 0.0
    %1039 = vmatpush1.msra.mxu0 0.0
    %1040 = vmatprep.subr.mxu0 0.0
    %1041 = vmatpush1.msra.mxu0 0.0
    %1042 = vmatprep.subr.mxu0 0.0
    %1043 = vmatpush1.msra.mxu0 0.0
    %1044 = vmatprep.subr.mxu0 0.0
    %1045 = vmatpush1.msra.mxu0 0.0
    %1046 = vmatprep.subr.mxu0 0.0
    %1047 = vmatpush1.msra.mxu0 0.0
    %1048 = vmatprep.subr.mxu0 0.0
    %1049 = vmatpush1.msra.mxu0 0.0
    %1050 = vmatprep.subr.mxu0 0.0
    %1051 = vmatpush1.msra.mxu0 0.0
    %1052 = vmatprep.subr.mxu0 0.0
    %1053 = vmatpush1.msra.mxu0 0.0
    %1054 = vmatprep.subr.mxu0 0.0
    %1055 = vmatpush1.msra.mxu0 0.0
    %1056 = vmatprep.subr.mxu0 0.0
    %1057 = vmatpush1.msra.mxu0 0.0
    %1058 = vmatprep.subr.mxu0 0.0
    %1059 = vmatpush1.msra.mxu0 0.0
    %1060 = vmatprep.subr.mxu0 0.0
    %1061 = vmatpush1.msra.mxu0 %v23
    %1062 = vmatprep.subr.mxu0 0.0
    %1063 = vmatpush2.msra.mxu0 0.0
    %1064 = vmatprep.subr.mxu0 0.0
    %1065 = vmatpush2.msra.mxu0 0.0
    %1066 = vmatprep.subr.mxu0 0.0
    %1067 = vmatpush2.msra.mxu0 0.0
    %1068 = vmatprep.subr.mxu0 0.0
    %1069 = vmatpush2.msra.mxu0 0.0
    %1070 = vmatprep.subr.mxu0 0.0
    %1071 = vmatpush2.msra.mxu0 0.0
    %1072 = vmatprep.subr.mxu0 0.0
    %1073 = vmatpush2.msra.mxu0 0.0
    %1074 = vmatprep.subr.mxu0 0.0
    %1075 = vmatpush2.msra.mxu0 0.0
    %1076 = vmatprep.subr.mxu0 0.0
    %1077 = vmatpush2.msra.mxu0 0.0
    %1078 = vmatprep.subr.mxu0 0.0
    %1079 = vmatpush2.msra.mxu0 0.0
    %1080 = vmatprep.subr.mxu0 0.0
    %1081 = vmatpush2.msra.mxu0 0.0
    %1082 = vmatprep.subr.mxu0 0.0
    %1083 = vmatpush2.msra.mxu0 0.0
    %1084 = vmatprep.subr.mxu0 0.0
    %1085 = vmatpush2.msra.mxu0 0.0
    %1086 = vmatprep.subr.mxu0 0.0
    %1087 = vmatpush2.msra.mxu0 0.0
    %1088 = vmatprep.subr.mxu0 0.0
    %1089 = vmatpush2.msra.mxu0 0.0
    %1090 = vmatprep.subr.mxu0 0.0
    %1091 = vmatpush2.msra.mxu0 0.0
    %1092 = vmatprep.subr.mxu0 0.0
    %1093 = vmatpush2.msra.mxu0 0.0
    %1094 = vmatprep.mubr.f32.mxu0 0.0
    %1095 = vmatmul.mubr.f32.gmra.mxu0 %v1028
    %v1096 = vpop.f32.mrf.mxu0
    %v1097 = vadd.f32 0.0, %v1096
    %v1098 = vpop.f32.mrf.mxu0
    %1099 = vdwg.mxu0
    %1101 = vrot.lane.b32.xlu0 %v1097, 32
    %v1102 = vpop.permute.xlu0 %1101
    %v1104 = vadd.f32 %v41, %v1102
    %v1105 = vmul.f32 %v1104, 0.5
    %1107 = vrot.lane.b32.xlu0 %v1105, 96
    %v1108 = vpop.permute.xlu0 %1107
    %1111 = vrot.lane.b32.xlu0 %v1104, 96
    %v1112 = vpop.permute.xlu0 %1111
    %v1114 = vsel %vm26, %v1108, %v1112
    %v1115 = vtanh.pop %v1114
    %v1116 = vmul.f32 %v1115, 0.5
    %v1117 = vadd.f32 %v1116, 0.5
    %v1118 = vsel %vm26, %v1117, %v1115
    %v1119 = vmul.f32 %v1118, %v1018
    %1121 = vrot.lane.b32.xlu0 %v1118, 104
    %v1122 = vpop.permute.xlu0 %1121
    %v1124 = vmul.f32 %v1118, %v1122
    %1126 = vrot.lane.b32.xlu0 %v1124, 8
    %v1127 = vpop.permute.xlu0 %1126
    %v1129 = vadd.f32 %v1119, %v1127
    %v1130 = vtanh.pop %v1129
    %1132 = vrot.lane.b32.xlu0 %v1130, 8
    %v1133 = vpop.permute.xlu0 %1132
    %v1135 = vmul.f32 %v1118, %v1133
    %1137 = vrot.lane.b32.xlu0 %v1135, 112
    %v1138 = vpop.permute.xlu0 %1137
    %v1139 = vsel %vm64, %v1138, 0
    %1141 = vmatprep.subr.mxu0 0.0
    %1142 = vmatpush1.msra.mxu0 0.0
    %1143 = vmatprep.subr.mxu0 0.0
    %1144 = vmatpush1.msra.mxu0 0.0
    %1145 = vmatprep.subr.mxu0 0.0
    %1146 = vmatpush1.msra.mxu0 0.0
    %1147 = vmatprep.subr.mxu0 0.0
    %1148 = vmatpush1.msra.mxu0 0.0
    %1149 = vmatprep.subr.mxu0 0.0
    %1150 = vmatpush1.msra.mxu0 0.0
    %1151 = vmatprep.subr.mxu0 0.0
    %1152 = vmatpush1.msra.mxu0 0.0
    %1153 = vmatprep.subr.mxu0 0.0
    %1154 = vmatpush1.msra.mxu0 0.0
    %1155 = vmatprep.subr.mxu0 0.0
    %1156 = vmatpush1.msra.mxu0 0.0
    %1157 = vmatprep.subr.mxu0 0.0
    %1158 = vmatpush1.msra.mxu0 0.0
    %1159 = vmatprep.subr.mxu0 0.0
    %1160 = vmatpush1.msra.mxu0 0.0
    %1161 = vmatprep.subr.mxu0 0.0
    %1162 = vmatpush1.msra.mxu0 0.0
    %1163 = vmatprep.subr.mxu0 0.0
    %1164 = vmatpush1.msra.mxu0 0.0
    %1165 = vmatprep.subr.mxu0 0.0
    %1166 = vmatpush1.msra.mxu0 0.0
    %1167 = vmatprep.subr.mxu0 0.0
    %1168 = vmatpush1.msra.mxu0 0.0
    %1169 = vmatprep.subr.mxu0 0.0
    %1170 = vmatpush1.msra.mxu0 0.0
    %1171 = vmatprep.subr.mxu0 0.0
    %1172 = vmatpush1.msra.mxu0 %v23
    %1173 = vmatprep.subr.mxu0 0.0
    %1174 = vmatpush2.msra.mxu0 0.0
    %1175 = vmatprep.subr.mxu0 0.0
    %1176 = vmatpush2.msra.mxu0 0.0
    %1177 = vmatprep.subr.mxu0 0.0
    %1178 = vmatpush2.msra.mxu0 0.0
    %1179 = vmatprep.subr.mxu0 0.0
    %1180 = vmatpush2.msra.mxu0 0.0
    %1181 = vmatprep.subr.mxu0 0.0
    %1182 = vmatpush2.msra.mxu0 0.0
    %1183 = vmatprep.subr.mxu0 0.0
    %1184 = vmatpush2.msra.mxu0 0.0
    %1185 = vmatprep.subr.mxu0 0.0
    %1186 = vmatpush2.msra.mxu0 0.0
    %1187 = vmatprep.subr.mxu0 0.0
    %1188 = vmatpush2.msra.mxu0 0.0
    %1189 = vmatprep.subr.mxu0 0.0
    %1190 = vmatpush2.msra.mxu0 0.0
    %1191 = vmatprep.subr.mxu0 0.0
    %1192 = vmatpush2.msra.mxu0 0.0
    %1193 = vmatprep.subr.mxu0 0.0
    %1194 = vmatpush2.msra.mxu0 0.0
    %1195 = vmatprep.subr.mxu0 0.0
    %1196 = vmatpush2.msra.mxu0 0.0
    %1197 = vmatprep.subr.mxu0 0.0
    %1198 = vmatpush2.msra.mxu0 0.0
    %1199 = vmatprep.subr.mxu0 0.0
    %1200 = vmatpush2.msra.mxu0 0.0
    %1201 = vmatprep.subr.mxu0 0.0
    %1202 = vmatpush2.msra.mxu0 0.0
    %1203 = vmatprep.subr.mxu0 0.0
    %1204 = vmatpush2.msra.mxu0 0.0
    %1205 = vmatprep.mubr.f32.mxu0 0.0
    %1206 = vmatmul.mubr.f32.gmra.mxu0 %v1139
    %v1207 = vpop.f32.mrf.mxu0
    %v1208 = vadd.f32 0.0, %v1207
    %v1209 = vpop.f32.mrf.mxu0
    %1210 = vdwg.mxu0
    %1212 = vrot.lane.b32.xlu0 %v1208, 64
    %v1213 = vpop.permute.xlu0 %1212
    %v1215 = vadd.f32 %v41, %v1213
    %v1216 = vmul.f32 %v1215, 0.5
    %1218 = vrot.lane.b32.xlu0 %v1216, 64
    %v1219 = vpop.permute.xlu0 %1218
    %1222 = vrot.lane.b32.xlu0 %v1215, 64
    %v1223 = vpop.permute.xlu0 %1222
    %v1225 = vsel %vm26, %v1219, %v1223
    %v1226 = vtanh.pop %v1225
    %v1227 = vmul.f32 %v1226, 0.5
    %v1228 = vadd.f32 %v1227, 0.5
    %v1229 = vsel %vm26, %v1228, %v1226
    %v1230 = vmul.f32 %v1229, %v1129
    %1232 = vrot.lane.b32.xlu0 %v1229, 104
    %v1233 = vpop.permute.xlu0 %1232
    %v1235 = vmul.f32 %v1229, %v1233
    %1237 = vrot.lane.b32.xlu0 %v1235, 8
    %v1238 = vpop.permute.xlu0 %1237
    %v1240 = vadd.f32 %v1230, %v1238
    %v1241 = vtanh.pop %v1240
    %1243 = vrot.lane.b32.xlu0 %v1241, 8
    %v1244 = vpop.permute.xlu0 %1243
    %v1246 = vmul.f32 %v1229, %v1244
    %1248 = vrot.lane.b32.xlu0 %v1246, 112
    %v1249 = vpop.permute.xlu0 %1248
    %v1250 = vsel %vm64, %v1249, 0
    %1252 = vmatprep.subr.mxu0 0.0
    %1253 = vmatpush1.msra.mxu0 0.0
    %1254 = vmatprep.subr.mxu0 0.0
    %1255 = vmatpush1.msra.mxu0 0.0
    %1256 = vmatprep.subr.mxu0 0.0
    %1257 = vmatpush1.msra.mxu0 0.0
    %1258 = vmatprep.subr.mxu0 0.0
    %1259 = vmatpush1.msra.mxu0 0.0
    %1260 = vmatprep.subr.mxu0 0.0
    %1261 = vmatpush1.msra.mxu0 0.0
    %1262 = vmatprep.subr.mxu0 0.0
    %1263 = vmatpush1.msra.mxu0 0.0
    %1264 = vmatprep.subr.mxu0 0.0
    %1265 = vmatpush1.msra.mxu0 0.0
    %1266 = vmatprep.subr.mxu0 0.0
    %1267 = vmatpush1.msra.mxu0 0.0
    %1268 = vmatprep.subr.mxu0 0.0
    %1269 = vmatpush1.msra.mxu0 0.0
    %1270 = vmatprep.subr.mxu0 0.0
    %1271 = vmatpush1.msra.mxu0 0.0
    %1272 = vmatprep.subr.mxu0 0.0
    %1273 = vmatpush1.msra.mxu0 0.0
    %1274 = vmatprep.subr.mxu0 0.0
    %1275 = vmatpush1.msra.mxu0 0.0
    %1276 = vmatprep.subr.mxu0 0.0
    %1277 = vmatpush1.msra.mxu0 0.0
    %1278 = vmatprep.subr.mxu0 0.0
    %1279 = vmatpush1.msra.mxu0 0.0
    %1280 = vmatprep.subr.mxu0 0.0
    %1281 = vmatpush1.msra.mxu0 0.0
    %1282 = vmatprep.subr.mxu0 0.0
    %1283 = vmatpush1.msra.mxu0 %v23
    %1284 = vmatprep.subr.mxu0 0.0
    %1285 = vmatpush2.msra.mxu0 0.0
    %1286 = vmatprep.subr.mxu0 0.0
    %1287 = vmatpush2.msra.mxu0 0.0
    %1288 = vmatprep.subr.mxu0 0.0
    %1289 = vmatpush2.msra.mxu0 0.0
    %1290 = vmatprep.subr.mxu0 0.0
    %1291 = vmatpush2.msra.mxu0 0.0
    %1292 = vmatprep.subr.mxu0 0.0
    %1293 = vmatpush2.msra.mxu0 0.0
    %1294 = vmatprep.subr.mxu0 0.0
    %1295 = vmatpush2.msra.mxu0 0.0
    %1296 = vmatprep.subr.mxu0 0.0
    %1297 = vmatpush2.msra.mxu0 0.0
    %1298 = vmatprep.subr.mxu0 0.0
    %1299 = vmatpush2.msra.mxu0 0.0
    %1300 = vmatprep.subr.mxu0 0.0
    %1301 = vmatpush2.msra.mxu0 0.0
    %1302 = vmatprep.subr.mxu0 0.0
    %1303 = vmatpush2.msra.mxu0 0.0
    %1304 = vmatprep.subr.mxu0 0.0
    %1305 = vmatpush2.msra.mxu0 0.0
    %1306 = vmatprep.subr.mxu0 0.0
    %1307 = vmatpush2.msra.mxu0 0.0
    %1308 = vmatprep.subr.mxu0 0.0
    %1309 = vmatpush2.msra.mxu0 0.0
    %1310 = vmatprep.subr.mxu0 0.0
    %1311 = vmatpush2.msra.mxu0 0.0
    %1312 = vmatprep.subr.mxu0 0.0
    %1313 = vmatpush2.msra.mxu0 0.0
    %1314 = vmatprep.subr.mxu0 0.0
    %1315 = vmatpush2.msra.mxu0 0.0
    %1316 = vmatprep.mubr.f32.mxu0 0.0
    %1317 = vmatmul.mubr.f32.gmra.mxu0 %v1250
    %v1318 = vpop.f32.mrf.mxu0
    %v1319 = vadd.f32 0.0, %v1318
    %v1320 = vpop.f32.mrf.mxu0
    %1321 = vdwg.mxu0
    %1323 = vrot.lane.b32.xlu0 %v1319, 96
    %v1324 = vpop.permute.xlu0 %1323
    %v1326 = vadd.f32 %v41, %v1324
    %v1327 = vmul.f32 %v1326, 0.5
    %1329 = vrot.lane.b32.xlu0 %v1327, 32
    %v1330 = vpop.permute.xlu0 %1329
    %1333 = vrot.lane.b32.xlu0 %v1326, 32
    %v1334 = vpop.permute.xlu0 %1333
    %v1336 = vsel %vm26, %v1330, %v1334
    %v1337 = vtanh.pop %v1336
    %v1338 = vmul.f32 %v1337, 0.5
    %v1339 = vadd.f32 %v1338, 0.5
    %v1340 = vsel %vm26, %v1339, %v1337
    %v1341 = vmul.f32 %v1340, %v1240
    %1343 = vrot.lane.b32.xlu0 %v1340, 104
    %v1344 = vpop.permute.xlu0 %1343
    %v1346 = vmul.f32 %v1340, %v1344
    %1348 = vrot.lane.b32.xlu0 %v1346, 8
    %v1349 = vpop.permute.xlu0 %1348
    %v1351 = vadd.f32 %v1341, %v1349
    %v1352 = vtanh.pop %v1351
    %1354 = vrot.lane.b32.xlu0 %v1352, 8
    %v1355 = vpop.permute.xlu0 %1354
    %v1357 = vmul.f32 %v1340, %v1355
    %1359 = vrot.lane.b32.xlu0 %v1357, 112
    %v1360 = vpop.permute.xlu0 %1359
    %v1361 = vsel %vm64, %v1360, 0
    %1363 = vmatprep.subr.mxu0 0.0
    %1364 = vmatpush1.msra.mxu0 0.0
    %1365 = vmatprep.subr.mxu0 0.0
    %1366 = vmatpush1.msra.mxu0 0.0
    %1367 = vmatprep.subr.mxu0 0.0
    %1368 = vmatpush1.msra.mxu0 0.0
    %1369 = vmatprep.subr.mxu0 0.0
    %1370 = vmatpush1.msra.mxu0 0.0
    %1371 = vmatprep.subr.mxu0 0.0
    %1372 = vmatpush1.msra.mxu0 0.0
    %1373 = vmatprep.subr.mxu0 0.0
    %1374 = vmatpush1.msra.mxu0 0.0
    %1375 = vmatprep.subr.mxu0 0.0
    %1376 = vmatpush1.msra.mxu0 0.0
    %1377 = vmatprep.subr.mxu0 0.0
    %1378 = vmatpush1.msra.mxu0 0.0
    %1379 = vmatprep.subr.mxu0 0.0
    %1380 = vmatpush1.msra.mxu0 0.0
    %1381 = vmatprep.subr.mxu0 0.0
    %1382 = vmatpush1.msra.mxu0 0.0
    %1383 = vmatprep.subr.mxu0 0.0
    %1384 = vmatpush1.msra.mxu0 0.0
    %1385 = vmatprep.subr.mxu0 0.0
    %1386 = vmatpush1.msra.mxu0 0.0
    %1387 = vmatprep.subr.mxu0 0.0
    %1388 = vmatpush1.msra.mxu0 0.0
    %1389 = vmatprep.subr.mxu0 0.0
    %1390 = vmatpush1.msra.mxu0 0.0
    %1391 = vmatprep.subr.mxu0 0.0
    %1392 = vmatpush1.msra.mxu0 0.0
    %1393 = vmatprep.subr.mxu0 0.0
    %1394 = vmatpush1.msra.mxu0 %v23
    %1395 = vmatprep.subr.mxu0 0.0
    %1396 = vmatpush2.msra.mxu0 0.0
    %1397 = vmatprep.subr.mxu0 0.0
    %1398 = vmatpush2.msra.mxu0 0.0
    %1399 = vmatprep.subr.mxu0 0.0
    %1400 = vmatpush2.msra.mxu0 0.0
    %1401 = vmatprep.subr.mxu0 0.0
    %1402 = vmatpush2.msra.mxu0 0.0
    %1403 = vmatprep.subr.mxu0 0.0
    %1404 = vmatpush2.msra.mxu0 0.0
    %1405 = vmatprep.subr.mxu0 0.0
    %1406 = vmatpush2.msra.mxu0 0.0
    %1407 = vmatprep.subr.mxu0 0.0
    %1408 = vmatpush2.msra.mxu0 0.0
    %1409 = vmatprep.subr.mxu0 0.0
    %1410 = vmatpush2.msra.mxu0 0.0
    %1411 = vmatprep.subr.mxu0 0.0
    %1412 = vmatpush2.msra.mxu0 0.0
    %1413 = vmatprep.subr.mxu0 0.0
    %1414 = vmatpush2.msra.mxu0 0.0
    %1415 = vmatprep.subr.mxu0 0.0
    %1416 = vmatpush2.msra.mxu0 0.0
    %1417 = vmatprep.subr.mxu0 0.0
    %1418 = vmatpush2.msra.mxu0 0.0
    %1419 = vmatprep.subr.mxu0 0.0
    %1420 = vmatpush2.msra.mxu0 0.0
    %1421 = vmatprep.subr.mxu0 0.0
    %1422 = vmatpush2.msra.mxu0 0.0
    %1423 = vmatprep.subr.mxu0 0.0
    %1424 = vmatpush2.msra.mxu0 0.0
    %1425 = vmatprep.subr.mxu0 0.0
    %1426 = vmatpush2.msra.mxu0 0.0
    %1427 = vmatprep.mubr.f32.mxu0 0.0
    %1428 = vmatmul.mubr.f32.gmra.mxu0 %v1361
    %v1429 = vpop.f32.mrf.mxu0
    %v1430 = vadd.f32 0.0, %v1429
    %v1431 = vpop.f32.mrf.mxu0
    %1432 = vdwg.mxu0
    %v1433 = vadd.f32 %v42, %v1430
    %v1434 = vmul.f32 %v1433, 0.5
    %v1435 = vsel %vm26, %v1434, %v1433
    %v1436 = vtanh.pop %v1435
    %v1437 = vmul.f32 %v1436, 0.5
    %v1438 = vadd.f32 %v1437, 0.5
    %v1439 = vsel %vm26, %v1438, %v1436
    %v1440 = vmul.f32 %v1439, %v1351
    %1442 = vrot.lane.b32.xlu0 %v1439, 104
    %v1443 = vpop.permute.xlu0 %1442
    %v1445 = vmul.f32 %v1439, %v1443
    %1447 = vrot.lane.b32.xlu0 %v1445, 8
    %v1448 = vpop.permute.xlu0 %1447
    %v1450 = vadd.f32 %v1440, %v1448
    %v1451 = vtanh.pop %v1450
    %1453 = vrot.lane.b32.xlu0 %v1451, 8
    %v1454 = vpop.permute.xlu0 %1453
    %v1456 = vmul.f32 %v1439, %v1454
    %1458 = vrot.lane.b32.xlu0 %v1456, 112
    %v1459 = vpop.permute.xlu0 %1458
    %v1460 = vsel %vm64, %v1459, 0
    %1462 = vmatprep.subr.mxu0 0.0
    %1463 = vmatpush1.msra.mxu0 0.0
    %1464 = vmatprep.subr.mxu0 0.0
    %1465 = vmatpush1.msra.mxu0 0.0
    %1466 = vmatprep.subr.mxu0 0.0
    %1467 = vmatpush1.msra.mxu0 0.0
    %1468 = vmatprep.subr.mxu0 0.0
    %1469 = vmatpush1.msra.mxu0 0.0
    %1470 = vmatprep.subr.mxu0 0.0
    %1471 = vmatpush1.msra.mxu0 0.0
    %1472 = vmatprep.subr.mxu0 0.0
    %1473 = vmatpush1.msra.mxu0 0.0
    %1474 = vmatprep.subr.mxu0 0.0
    %1475 = vmatpush1.msra.mxu0 0.0
    %1476 = vmatprep.subr.mxu0 0.0
    %1477 = vmatpush1.msra.mxu0 0.0
    %1478 = vmatprep.subr.mxu0 0.0
    %1479 = vmatpush1.msra.mxu0 0.0
    %1480 = vmatprep.subr.mxu0 0.0
    %1481 = vmatpush1.msra.mxu0 0.0
    %1482 = vmatprep.subr.mxu0 0.0
    %1483 = vmatpush1.msra.mxu0 0.0
    %1484 = vmatprep.subr.mxu0 0.0
    %1485 = vmatpush1.msra.mxu0 0.0
    %1486 = vmatprep.subr.mxu0 0.0
    %1487 = vmatpush1.msra.mxu0 0.0
    %1488 = vmatprep.subr.mxu0 0.0
    %1489 = vmatpush1.msra.mxu0 0.0
    %1490 = vmatprep.subr.mxu0 0.0
    %1491 = vmatpush1.msra.mxu0 0.0
    %1492 = vmatprep.subr.mxu0 0.0
    %1493 = vmatpush1.msra.mxu0 %v23
    %1494 = vmatprep.subr.mxu0 0.0
    %1495 = vmatpush2.msra.mxu0 0.0
    %1496 = vmatprep.subr.mxu0 0.0
    %1497 = vmatpush2.msra.mxu0 0.0
    %1498 = vmatprep.subr.mxu0 0.0
    %1499 = vmatpush2.msra.mxu0 0.0
    %1500 = vmatprep.subr.mxu0 0.0
    %1501 = vmatpush2.msra.mxu0 0.0
    %1502 = vmatprep.subr.mxu0 0.0
    %1503 = vmatpush2.msra.mxu0 0.0
    %1504 = vmatprep.subr.mxu0 0.0
    %1505 = vmatpush2.msra.mxu0 0.0
    %1506 = vmatprep.subr.mxu0 0.0
    %1507 = vmatpush2.msra.mxu0 0.0
    %1508 = vmatprep.subr.mxu0 0.0
    %1509 = vmatpush2.msra.mxu0 0.0
    %1510 = vmatprep.subr.mxu0 0.0
    %1511 = vmatpush2.msra.mxu0 0.0
    %1512 = vmatprep.subr.mxu0 0.0
    %1513 = vmatpush2.msra.mxu0 0.0
    %1514 = vmatprep.subr.mxu0 0.0
    %1515 = vmatpush2.msra.mxu0 0.0
    %1516 = vmatprep.subr.mxu0 0.0
    %1517 = vmatpush2.msra.mxu0 0.0
    %1518 = vmatprep.subr.mxu0 0.0
    %1519 = vmatpush2.msra.mxu0 0.0
    %1520 = vmatprep.subr.mxu0 0.0
    %1521 = vmatpush2.msra.mxu0 0.0
    %1522 = vmatprep.subr.mxu0 0.0
    %1523 = vmatpush2.msra.mxu0 0.0
    %1524 = vmatprep.subr.mxu0 0.0
    %1525 = vmatpush2.msra.mxu0 0.0
    %1526 = vmatprep.mubr.f32.mxu0 0.0
    %1527 = vmatmul.mubr.f32.gmra.mxu0 %v1460
    %v1528 = vpop.f32.mrf.mxu0
    %v1529 = vadd.f32 0.0, %v1528
    %v1530 = vpop.f32.mrf.mxu0
    %1531 = vdwg.mxu0
    %1533 = vrot.lane.b32.xlu0 %v1529, 32
    %v1534 = vpop.permute.xlu0 %1533
    %v1536 = vadd.f32 %v42, %v1534
    %v1537 = vmul.f32 %v1536, 0.5
    %1539 = vrot.lane.b32.xlu0 %v1537, 96
    %v1540 = vpop.permute.xlu0 %1539
    %1543 = vrot.lane.b32.xlu0 %v1536, 96
    %v1544 = vpop.permute.xlu0 %1543
    %v1546 = vsel %vm26, %v1540, %v1544
    %v1547 = vtanh.pop %v1546
    %v1548 = vmul.f32 %v1547, 0.5
    %v1549 = vadd.f32 %v1548, 0.5
    %v1550 = vsel %vm26, %v1549, %v1547
    %v1551 = vmul.f32 %v1550, %v1450
    %1553 = vrot.lane.b32.xlu0 %v1550, 104
    %v1554 = vpop.permute.xlu0 %1553
    %v1556 = vmul.f32 %v1550, %v1554
    %1558 = vrot.lane.b32.xlu0 %v1556, 8
    %v1559 = vpop.permute.xlu0 %1558
    %v1561 = vadd.f32 %v1551, %v1559
    %v1562 = vtanh.pop %v1561
    %1564 = vrot.lane.b32.xlu0 %v1562, 8
    %v1565 = vpop.permute.xlu0 %1564
    %v1567 = vmul.f32 %v1550, %v1565
    %1569 = vrot.lane.b32.xlu0 %v1567, 112
    %v1570 = vpop.permute.xlu0 %1569
    %v1571 = vsel %vm64, %v1570, 0
    %1573 = vmatprep.subr.mxu0 0.0
    %1574 = vmatpush1.msra.mxu0 0.0
    %1575 = vmatprep.subr.mxu0 0.0
    %1576 = vmatpush1.msra.mxu0 0.0
    %1577 = vmatprep.subr.mxu0 0.0
    %1578 = vmatpush1.msra.mxu0 0.0
    %1579 = vmatprep.subr.mxu0 0.0
    %1580 = vmatpush1.msra.mxu0 0.0
    %1581 = vmatprep.subr.mxu0 0.0
    %1582 = vmatpush1.msra.mxu0 0.0
    %1583 = vmatprep.subr.mxu0 0.0
    %1584 = vmatpush1.msra.mxu0 0.0
    %1585 = vmatprep.subr.mxu0 0.0
    %1586 = vmatpush1.msra.mxu0 0.0
    %1587 = vmatprep.subr.mxu0 0.0
    %1588 = vmatpush1.msra.mxu0 0.0
    %1589 = vmatprep.subr.mxu0 0.0
    %1590 = vmatpush1.msra.mxu0 0.0
    %1591 = vmatprep.subr.mxu0 0.0
    %1592 = vmatpush1.msra.mxu0 0.0
    %1593 = vmatprep.subr.mxu0 0.0
    %1594 = vmatpush1.msra.mxu0 0.0
    %1595 = vmatprep.subr.mxu0 0.0
    %1596 = vmatpush1.msra.mxu0 0.0
    %1597 = vmatprep.subr.mxu0 0.0
    %1598 = vmatpush1.msra.mxu0 0.0
    %1599 = vmatprep.subr.mxu0 0.0
    %1600 = vmatpush1.msra.mxu0 0.0
    %1601 = vmatprep.subr.mxu0 0.0
    %1602 = vmatpush1.msra.mxu0 0.0
    %1603 = vmatprep.subr.mxu0 0.0
    %1604 = vmatpush1.msra.mxu0 %v23
    %1605 = vmatprep.subr.mxu0 0.0
    %1606 = vmatpush2.msra.mxu0 0.0
    %1607 = vmatprep.subr.mxu0 0.0
    %1608 = vmatpush2.msra.mxu0 0.0
    %1609 = vmatprep.subr.mxu0 0.0
    %1610 = vmatpush2.msra.mxu0 0.0
    %1611 = vmatprep.subr.mxu0 0.0
    %1612 = vmatpush2.msra.mxu0 0.0
    %1613 = vmatprep.subr.mxu0 0.0
    %1614 = vmatpush2.msra.mxu0 0.0
    %1615 = vmatprep.subr.mxu0 0.0
    %1616 = vmatpush2.msra.mxu0 0.0
    %1617 = vmatprep.subr.mxu0 0.0
    %1618 = vmatpush2.msra.mxu0 0.0
    %1619 = vmatprep.subr.mxu0 0.0
    %1620 = vmatpush2.msra.mxu0 0.0
    %1621 = vmatprep.subr.mxu0 0.0
    %1622 = vmatpush2.msra.mxu0 0.0
    %1623 = vmatprep.subr.mxu0 0.0
    %1624 = vmatpush2.msra.mxu0 0.0
    %1625 = vmatprep.subr.mxu0 0.0
    %1626 = vmatpush2.msra.mxu0 0.0
    %1627 = vmatprep.subr.mxu0 0.0
    %1628 = vmatpush2.msra.mxu0 0.0
    %1629 = vmatprep.subr.mxu0 0.0
    %1630 = vmatpush2.msra.mxu0 0.0
    %1631 = vmatprep.subr.mxu0 0.0
    %1632 = vmatpush2.msra.mxu0 0.0
    %1633 = vmatprep.subr.mxu0 0.0
    %1634 = vmatpush2.msra.mxu0 0.0
    %1635 = vmatprep.subr.mxu0 0.0
    %1636 = vmatpush2.msra.mxu0 0.0
    %1637 = vmatprep.mubr.f32.mxu0 0.0
    %1638 = vmatmul.mubr.f32.gmra.mxu0 %v1571
    %v1639 = vpop.f32.mrf.mxu0
    %v1640 = vadd.f32 0.0, %v1639
    %v1641 = vpop.f32.mrf.mxu0
    %1642 = vdwg.mxu0
    %1644 = vrot.lane.b32.xlu0 %v1640, 64
    %v1645 = vpop.permute.xlu0 %1644
    %v1647 = vadd.f32 %v42, %v1645
    %v1648 = vmul.f32 %v1647, 0.5
    %1650 = vrot.lane.b32.xlu0 %v1648, 64
    %v1651 = vpop.permute.xlu0 %1650
    %1654 = vrot.lane.b32.xlu0 %v1647, 64
    %v1655 = vpop.permute.xlu0 %1654
    %v1657 = vsel %vm26, %v1651, %v1655
    %v1658 = vtanh.pop %v1657
    %v1659 = vmul.f32 %v1658, 0.5
    %v1660 = vadd.f32 %v1659, 0.5
    %v1661 = vsel %vm26, %v1660, %v1658
    %v1662 = vmul.f32 %v1661, %v1561
    %1664 = vrot.lane.b32.xlu0 %v1661, 104
    %v1665 = vpop.permute.xlu0 %1664
    %v1667 = vmul.f32 %v1661, %v1665
    %1669 = vrot.lane.b32.xlu0 %v1667, 8
    %v1670 = vpop.permute.xlu0 %1669
    %v1672 = vadd.f32 %v1662, %v1670
    %v1673 = vtanh.pop %v1672
    %1675 = vrot.lane.b32.xlu0 %v1673, 8
    %v1676 = vpop.permute.xlu0 %1675
    %v1678 = vmul.f32 %v1661, %v1676
    %1680 = vrot.lane.b32.xlu0 %v1678, 112
    %v1681 = vpop.permute.xlu0 %1680
    %v1682 = vsel %vm64, %v1681, 0
    %1684 = vmatprep.subr.mxu0 0.0
    %1685 = vmatpush1.msra.mxu0 0.0
    %1686 = vmatprep.subr.mxu0 0.0
    %1687 = vmatpush1.msra.mxu0 0.0
    %1688 = vmatprep.subr.mxu0 0.0
    %1689 = vmatpush1.msra.mxu0 0.0
    %1690 = vmatprep.subr.mxu0 0.0
    %1691 = vmatpush1.msra.mxu0 0.0
    %1692 = vmatprep.subr.mxu0 0.0
    %1693 = vmatpush1.msra.mxu0 0.0
    %1694 = vmatprep.subr.mxu0 0.0
    %1695 = vmatpush1.msra.mxu0 0.0
    %1696 = vmatprep.subr.mxu0 0.0
    %1697 = vmatpush1.msra.mxu0 0.0
    %1698 = vmatprep.subr.mxu0 0.0
    %1699 = vmatpush1.msra.mxu0 0.0
    %1700 = vmatprep.subr.mxu0 0.0
    %1701 = vmatpush1.msra.mxu0 0.0
    %1702 = vmatprep.subr.mxu0 0.0
    %1703 = vmatpush1.msra.mxu0 0.0
    %1704 = vmatprep.subr.mxu0 0.0
    %1705 = vmatpush1.msra.mxu0 0.0
    %1706 = vmatprep.subr.mxu0 0.0
    %1707 = vmatpush1.msra.mxu0 0.0
    %1708 = vmatprep.subr.mxu0 0.0
    %1709 = vmatpush1.msra.mxu0 0.0
    %1710 = vmatprep.subr.mxu0 0.0
    %1711 = vmatpush1.msra.mxu0 0.0
    %1712 = vmatprep.subr.mxu0 0.0
    %1713 = vmatpush1.msra.mxu0 0.0
    %1714 = vmatprep.subr.mxu0 0.0
    %1715 = vmatpush1.msra.mxu0 %v23
    %1716 = vmatprep.subr.mxu0 0.0
    %1717 = vmatpush2.msra.mxu0 0.0
    %1718 = vmatprep.subr.mxu0 0.0
    %1719 = vmatpush2.msra.mxu0 0.0
    %1720 = vmatprep.subr.mxu0 0.0
    %1721 = vmatpush2.msra.mxu0 0.0
    %1722 = vmatprep.subr.mxu0 0.0
    %1723 = vmatpush2.msra.mxu0 0.0
    %1724 = vmatprep.subr.mxu0 0.0
    %1725 = vmatpush2.msra.mxu0 0.0
    %1726 = vmatprep.subr.mxu0 0.0
    %1727 = vmatpush2.msra.mxu0 0.0
    %1728 = vmatprep.subr.mxu0 0.0
    %1729 = vmatpush2.msra.mxu0 0.0
    %1730 = vmatprep.subr.mxu0 0.0
    %1731 = vmatpush2.msra.mxu0 0.0
    %1732 = vmatprep.subr.mxu0 0.0
    %1733 = vmatpush2.msra.mxu0 0.0
    %1734 = vmatprep.subr.mxu0 0.0
    %1735 = vmatpush2.msra.mxu0 0.0
    %1736 = vmatprep.subr.mxu0 0.0
    %1737 = vmatpush2.msra.mxu0 0.0
    %1738 = vmatprep.subr.mxu0 0.0
    %1739 = vmatpush2.msra.mxu0 0.0
    %1740 = vmatprep.subr.mxu0 0.0
    %1741 = vmatpush2.msra.mxu0 0.0
    %1742 = vmatprep.subr.mxu0 0.0
    %1743 = vmatpush2.msra.mxu0 0.0
    %1744 = vmatprep.subr.mxu0 0.0
    %1745 = vmatpush2.msra.mxu0 0.0
    %1746 = vmatprep.subr.mxu0 0.0
    %1747 = vmatpush2.msra.mxu0 0.0
    %1748 = vmatprep.mubr.f32.mxu0 0.0
    %1749 = vmatmul.mubr.f32.gmra.mxu0 %v1682
    %v1750 = vpop.f32.mrf.mxu0
    %v1751 = vadd.f32 0.0, %v1750
    %v1752 = vpop.f32.mrf.mxu0
    %1753 = vdwg.mxu0
    %1755 = vrot.lane.b32.xlu0 %v1751, 96
    %v1756 = vpop.permute.xlu0 %1755
    %v1758 = vadd.f32 %v42, %v1756
    %v1759 = vmul.f32 %v1758, 0.5
    %1761 = vrot.lane.b32.xlu0 %v1759, 32
    %v1762 = vpop.permute.xlu0 %1761
    %1765 = vrot.lane.b32.xlu0 %v1758, 32
    %v1766 = vpop.permute.xlu0 %1765
    %v1768 = vsel %vm26, %v1762, %v1766
    %v1769 = vtanh.pop %v1768
    %v1770 = vmul.f32 %v1769, 0.5
    %v1771 = vadd.f32 %v1770, 0.5
    %v1772 = vsel %vm26, %v1771, %v1769
    %v1773 = vmul.f32 %v1772, %v1672
    %1775 = vrot.lane.b32.xlu0 %v1772, 104
    %v1776 = vpop.permute.xlu0 %1775
    %v1778 = vmul.f32 %v1772, %v1776
    %1780 = vrot.lane.b32.xlu0 %v1778, 8
    %v1781 = vpop.permute.xlu0 %1780
    %v1783 = vadd.f32 %v1773, %v1781
    %v1784 = vtanh.pop %v1783
    %1786 = vrot.lane.b32.xlu0 %v1784, 8
    %v1787 = vpop.permute.xlu0 %1786
    %v1789 = vmul.f32 %v1772, %v1787
    %1791 = vrot.lane.b32.xlu0 %v271, 120
    %v1792 = vpop.permute.xlu0 %1791
    %1794 = vrot.lane.b32.xlu0 %v493, 8
    %v1795 = vpop.permute.xlu0 %1794
    %1797 = vrot.lane.b32.xlu0 %v592, 16
    %v1798 = vpop.permute.xlu0 %1797
    %1800 = vrot.lane.b32.xlu0 %v703, 24
    %v1801 = vpop.permute.xlu0 %1800
    %1803 = vrot.lane.b32.xlu0 %v814, 32
    %v1804 = vpop.permute.xlu0 %1803
    %1806 = vrot.lane.b32.xlu0 %v925, 40
    %v1807 = vpop.permute.xlu0 %1806
    %1809 = vrot.lane.b32.xlu0 %v1024, 48
    %v1810 = vpop.permute.xlu0 %1809
    %1812 = vrot.lane.b32.xlu0 %v1135, 56
    %v1813 = vpop.permute.xlu0 %1812
    %1815 = vrot.lane.b32.xlu0 %v1246, 64
    %v1816 = vpop.permute.xlu0 %1815
    %1818 = vrot.lane.b32.xlu0 %v1357, 72
    %v1819 = vpop.permute.xlu0 %1818
    %1821 = vrot.lane.b32.xlu0 %v1456, 80
    %v1822 = vpop.permute.xlu0 %1821
    %1824 = vrot.lane.b32.xlu0 %v1567, 88
    %v1825 = vpop.permute.xlu0 %1824
    %1827 = vrot.lane.b32.xlu0 %v1678, 96
    %v1828 = vpop.permute.xlu0 %1827
    %1831 = vrot.lane.b32.xlu0 %v1789, 104
    %v1832 = vpop.permute.xlu0 %1831
    %v1834 = vsel %vm64, %v163, %v1792
    %vm1835 = vcmask 130048
    %v1836 = vsel %vm1835, %v1834, %v382
    %vm1837 = vcmask 195584
    %v1838 = vsel %vm1837, %v1836, %v1795
    %vm1839 = vcmask 261120
    %v1840 = vsel %vm1839, %v1838, %v1798
    %vm1841 = vcmask 326656
    %v1842 = vsel %vm1841, %v1840, %v1801
    %vm1843 = vcmask 392192
    %v1844 = vsel %vm1843, %v1842, %v1804
    %vm1845 = vcmask 457728
    %v1846 = vsel %vm1845, %v1844, %v1807
    %vm1847 = vcmask 523264
    %v1848 = vsel %vm1847, %v1846, %v1810
    %vm1849 = vcmask 588800
    %v1850 = vsel %vm1849, %v1848, %v1813
    %vm1851 = vcmask 654336
    %v1852 = vsel %vm1851, %v1850, %v1816
    %vm1853 = vcmask 719872
    %v1854 = vsel %vm1853, %v1852, %v1819
    %vm1855 = vcmask 785408
    %v1856 = vsel %vm1855, %v1854, %v1822
    %vm1857 = vcmask 850944
    %v1858 = vsel %vm1857, %v1856, %v1825
    %vm1859 = vcmask 916480
    %v1860 = vsel %vm1859, %v1858, %v1828
    %vm1861 = vcmask 982016
    %v1862 = vsel %vm1861, %v1860, %v1832
    %1863 = vmatprep.subr.mxu0 0.0
    %1864 = vmatpush1.msra.mxu0 %v60
    %1865 = vmatprep.subr.mxu0 0.0
    %1866 = vmatpush1.msra.mxu0 %v59
    %1867 = vmatprep.subr.mxu0 0.0
    %1868 = vmatpush1.msra.mxu0 %v58
    %1869 = vmatprep.subr.mxu0 0.0
    %1870 = vmatpush1.msra.mxu0 %v57
    %1871 = vmatprep.subr.mxu0 0.0
    %1872 = vmatpush1.msra.mxu0 %v56
    %1873 = vmatprep.subr.mxu0 0.0
    %1874 = vmatpush1.msra.mxu0 %v55
    %1875 = vmatprep.subr.mxu0 0.0
    %1876 = vmatpush1.msra.mxu0 %v54
    %1877 = vmatprep.subr.mxu0 0.0
    %1878 = vmatpush1.msra.mxu0 %v53
    %1879 = vmatprep.subr.mxu0 0.0
    %1880 = vmatpush1.msra.mxu0 %v52
    %1881 = vmatprep.subr.mxu0 0.0
    %1882 = vmatpush1.msra.mxu0 %v51
    %1883 = vmatprep.subr.mxu0 0.0
    %1884 = vmatpush1.msra.mxu0 %v50
    %1885 = vmatprep.subr.mxu0 0.0
    %1886 = vmatpush1.msra.mxu0 %v49
    %1887 = vmatprep.subr.mxu0 0.0
    %1888 = vmatpush1.msra.mxu0 %v48
    %1889 = vmatprep.subr.mxu0 0.0
    %1890 = vmatpush1.msra.mxu0 %v47
    %1891 = vmatprep.subr.mxu0 0.0
    %1892 = vmatpush1.msra.mxu0 %v46
    %1893 = vmatprep.subr.mxu0 0.0
    %1894 = vmatpush1.msra.mxu0 %v45
    %1895 = vmatprep.subr.mxu0 0.0
    %1896 = vmatpush2.msra.mxu0 0.0
    %1897 = vmatprep.subr.mxu0 0.0
    %1898 = vmatpush2.msra.mxu0 0.0
    %1899 = vmatprep.subr.mxu0 0.0
    %1900 = vmatpush2.msra.mxu0 0.0
    %1901 = vmatprep.subr.mxu0 0.0
    %1902 = vmatpush2.msra.mxu0 0.0
    %1903 = vmatprep.subr.mxu0 0.0
    %1904 = vmatpush2.msra.mxu0 0.0
    %1905 = vmatprep.subr.mxu0 0.0
    %1906 = vmatpush2.msra.mxu0 0.0
    %1907 = vmatprep.subr.mxu0 0.0
    %1908 = vmatpush2.msra.mxu0 0.0
    %1909 = vmatprep.subr.mxu0 0.0
    %1910 = vmatpush2.msra.mxu0 0.0
    %1911 = vmatprep.subr.mxu0 0.0
    %1912 = vmatpush2.msra.mxu0 0.0
    %1913 = vmatprep.subr.mxu0 0.0
    %1914 = vmatpush2.msra.mxu0 0.0
    %1915 = vmatprep.subr.mxu0 0.0
    %1916 = vmatpush2.msra.mxu0 0.0
    %1917 = vmatprep.subr.mxu0 0.0
    %1918 = vmatpush2.msra.mxu0 0.0
    %1919 = vmatprep.subr.mxu0 0.0
    %1920 = vmatpush2.msra.mxu0 0.0
    %1921 = vmatprep.subr.mxu0 0.0
    %1922 = vmatpush2.msra.mxu0 0.0
    %1923 = vmatprep.subr.mxu0 0.0
    %1924 = vmatpush2.msra.mxu0 0.0
    %1925 = vmatprep.subr.mxu0 0.0
    %1926 = vmatpush2.msra.mxu0 0.0
    %1927 = vmatprep.mubr.f32.mxu0 0.0
    %1928 = vmatmul.mubr.f32.gmra.mxu0 %v1862
    %v1929 = vpop.f32.mrf.mxu0
    %v1930 = vadd.f32 0.0, %v1929
    %v1931 = vpop.f32.mrf.mxu0
    %1932 = vdwg.mxu0
    %v1933 = vadd.f32 %v35, %v1930
  $region30: #{lstm_net_forward.1} parent=0 // loop_footer
    %s32 = sadd.s32 1, %s28
  $region31: #{lstm_net_forward.1} parent=0 // loop_footer_branch
    %27 = sbr.rel target = $region27
  $region32: #{lstm_net_forward.1} parent=0 // loop_exit
    _
  %v1934 = vld [vmem:[%s3] sm:$0x1]
  %v1936 = vlaneseq
  %v1937 = vshrl.u32 %v1936, 7
  %v1938 = vsub.s32 0, %v1937
  %v1939 = vrot.slane %v1934, %v1938
  %v1941 = vadd.f32 %v35, %v1939
  %v1942 = vmax.f32 %v1941, 0.0
  %v1943 = vld [vmem:[%s4] sm:$0xff]
  %v1944 = vld [vmem:[%s4 + $0x8] sm:$0xff]
  %v1945 = vld [vmem:[%s4 + $0x10] sm:$0xff]
  %v1946 = vld [vmem:[%s4 + $0x18] sm:$0xff]
  %v1947 = vld [vmem:[%s4 + $0x20] sm:$0xff]
  %v1948 = vld [vmem:[%s4 + $0x28] sm:$0xff]
  %v1949 = vld [vmem:[%s4 + $0x30] sm:$0xff]
  %v1950 = vld [vmem:[%s4 + $0x38] sm:$0xff]
  %v1951 = vld [vmem:[%s4 + $0x40] sm:$0xff]
  %v1952 = vld [vmem:[%s4 + $0x48] sm:$0xff]
  %v1953 = vld [vmem:[%s4 + $0x50] sm:$0xff]
  %v1954 = vld [vmem:[%s4 + $0x58] sm:$0xff]
  %v1955 = vld [vmem:[%s4 + $0x60] sm:$0xff]
  %v1956 = vld [vmem:[%s4 + $0x68] sm:$0xff]
  %v1957 = vld [vmem:[%s4 + $0x70] sm:$0xff]
  %v1958 = vld [vmem:[%s4 + $0x78] sm:$0xff]
  %v1959 = vld [vmem:[%s5] sm:$0x1]
  %v1961 = vlaneseq
  %v1962 = vshrl.u32 %v1961, 7
  %v1963 = vsub.s32 0, %v1962
  %v1964 = vrot.slane %v1959, %v1963
  %1966 = vmatprep.subr.mxu0 0.0
  %1967 = vmatpush1.msra.mxu0 %v1958
  %1968 = vmatprep.subr.mxu0 0.0
  %1969 = vmatpush1.msra.mxu0 %v1957
  %1970 = vmatprep.subr.mxu0 0.0
  %1971 = vmatpush1.msra.mxu0 %v1956
  %1972 = vmatprep.subr.mxu0 0.0
  %1973 = vmatpush1.msra.mxu0 %v1955
  %1974 = vmatprep.subr.mxu0 0.0
  %1975 = vmatpush1.msra.mxu0 %v1954
  %1976 = vmatprep.subr.mxu0 0.0
  %1977 = vmatpush1.msra.mxu0 %v1953
  %1978 = vmatprep.subr.mxu0 0.0
  %1979 = vmatpush1.msra.mxu0 %v1952
  %1980 = vmatprep.subr.mxu0 0.0
  %1981 = vmatpush1.msra.mxu0 %v1951
  %1982 = vmatprep.subr.mxu0 0.0
  %1983 = vmatpush1.msra.mxu0 %v1950
  %1984 = vmatprep.subr.mxu0 0.0
  %1985 = vmatpush1.msra.mxu0 %v1949
  %1986 = vmatprep.subr.mxu0 0.0
  %1987 = vmatpush1.msra.mxu0 %v1948
  %1988 = vmatprep.subr.mxu0 0.0
  %1989 = vmatpush1.msra.mxu0 %v1947
  %1990 = vmatprep.subr.mxu0 0.0
  %1991 = vmatpush1.msra.mxu0 %v1946
  %1992 = vmatprep.subr.mxu0 0.0
  %1993 = vmatpush1.msra.mxu0 %v1945
  %1994 = vmatprep.subr.mxu0 0.0
  %1995 = vmatpush1.msra.mxu0 %v1944
  %1996 = vmatprep.subr.mxu0 0.0
  %1997 = vmatpush1.msra.mxu0 %v1943
  %1998 = vmatprep.subr.mxu0 0.0
  %1999 = vmatpush2.msra.mxu0 0.0
  %2000 = vmatprep.subr.mxu0 0.0
  %2001 = vmatpush2.msra.mxu0 0.0
  %2002 = vmatprep.subr.mxu0 0.0
  %2003 = vmatpush2.msra.mxu0 0.0
  %2004 = vmatprep.subr.mxu0 0.0
  %2005 = vmatpush2.msra.mxu0 0.0
  %2006 = vmatprep.subr.mxu0 0.0
  %2007 = vmatpush2.msra.mxu0 0.0
  %2008 = vmatprep.subr.mxu0 0.0
  %2009 = vmatpush2.msra.mxu0 0.0
  %2010 = vmatprep.subr.mxu0 0.0
  %2011 = vmatpush2.msra.mxu0 0.0
  %2012 = vmatprep.subr.mxu0 0.0
  %2013 = vmatpush2.msra.mxu0 0.0
  %2014 = vmatprep.subr.mxu0 0.0
  %2015 = vmatpush2.msra.mxu0 0.0
  %2016 = vmatprep.subr.mxu0 0.0
  %2017 = vmatpush2.msra.mxu0 0.0
  %2018 = vmatprep.subr.mxu0 0.0
  %2019 = vmatpush2.msra.mxu0 0.0
  %2020 = vmatprep.subr.mxu0 0.0
  %2021 = vmatpush2.msra.mxu0 0.0
  %2022 = vmatprep.subr.mxu0 0.0
  %2023 = vmatpush2.msra.mxu0 0.0
  %2024 = vmatprep.subr.mxu0 0.0
  %2025 = vmatpush2.msra.mxu0 0.0
  %2026 = vmatprep.subr.mxu0 0.0
  %2027 = vmatpush2.msra.mxu0 0.0
  %2028 = vmatprep.subr.mxu0 0.0
  %2029 = vmatpush2.msra.mxu0 0.0
  %2030 = vmatprep.mubr.f32.mxu0 0.0
  %2031 = vmatmul.mubr.f32.gmra.mxu0 %v1942
  %v2032 = vpop.f32.mrf.mxu0
  %v2033 = vadd.f32 %v1964, %v2032
  %v2034 = vpop.f32.mrf.mxu0
  %2035 = vdwg.mxu0
  %2036 = vst [vmem:[%s6] sm:$0xff] %v2033
  // Predicated region
  $region33: #{lstm_net_forward.1} parent=0 // pred_check
    _
  $region34: #{lstm_net_forward.1} parent=0 // pred_check_branch
    %2038 = sbr.rel (0) target = $region36
  $region35: #{lstm_net_forward.1} parent=0 // pred_region
    _
  $region36: #{lstm_net_forward.1} parent=0 // pred_fallthru
    _
  // Predicated region
  $region37: #{lstm_net_forward.1} parent=0 // pred_check
    _
  $region38: #{lstm_net_forward.1} parent=0 // pred_check_branch
    %2040 = sbr.rel (0) target = $region40
  $region39: #{lstm_net_forward.1} parent=0 // pred_region
    _
  $region40: #{lstm_net_forward.1} parent=0 // pred_fallthru
    _

</llo_original>
